<compile_context>
chip_gen: v5e
topology: v5e:2x2
jax: 0.10.0
libtpu: 0.0.40
codegen_flags: <defaults>
</compile_context>

<pallas_src>
import jax
import jax.numpy as jnp
import numpy as np
from jax.experimental import pallas as pl
from jax.experimental.pallas import tpu as pltpu


# ---------------------------------------------------------------- helpers ---

def _mm(w, x):
    """(O, I) @ (I, T) on VMEM-resident values.

    For tiny contractions (I <= 8) an MXU matmul fills <1% of the systolic
    array, so unroll as VPU broadcast multiply-adds (per perf review); larger
    channel counts keep the MXU path.
    """
    o, i_dim = w.shape
    if i_dim <= 8:
        acc = None
        for i in range(i_dim):
            term = w[:, i:i + 1] * x[i:i + 1, :]          # (O,1)*(1,T) -> (O,T)
            acc = term if acc is None else acc + term
        return acc
    return jnp.dot(w, x, preferred_element_type=jnp.float32)


# ---------------------------------------------------------------- kernels ---

def _pre_kernel(ms_ref, pan_ref, w_ms_ref, w_pan_ref, b_ref, o_ref):
    # o[:C]  = pre1(ms) + 1e-8 ;  o[C:] = pre2(pan) + 1e-8
    # (zero-padded stacked weights -> one dense (2C, T) output, no concat)
    o_ref[...] = (_mm(w_ms_ref[...], ms_ref[...])
                  + _mm(w_pan_ref[...], pan_ref[...])
                  + b_ref[...] + 1e-8)


def _fuse_kernel(amp_ref, pha_ref, w1a_ref, w1p_ref, b1_ref, w2_ref, b2_ref,
                 o_ref):
    # amp_ref / pha_ref: (2C, T) amplitude / phase in cat([ms, pan], C) order.
    # Stacked branches: rows [0,C) carry amp_fuse, rows [C,2C) carry pha_fuse
    # (zero-padded / block-diagonal weights), so all math runs on full
    # (2C, T) = (8, T) vregs at C=4.
    c2 = amp_ref.shape[0]
    c = c2 // 2
    h = (_mm(w1a_ref[...], amp_ref[...]) + _mm(w1p_ref[...], pha_ref[...])
         + b1_ref[...])
    h = jnp.where(h >= 0, h, 0.1 * h)                       # LeakyReLU(0.1)
    fused = _mm(w2_ref[...], h) + b2_ref[...]               # [amp_fuse; pha_fuse]

    # real = amp*cos(pha) + 2e-8 , imag = amp*sin(pha) + 1e-8 , written as one
    # stacked [real; imag] plane.  XLU sublane roll + VPU selects keep every
    # intermediate at full (2C, T) vreg occupancy (no half-height values).
    rolled = pltpu.roll(fused, shift=c, axis=0)             # [pha_fuse; amp_fuse]
    rows = jax.lax.broadcasted_iota(jnp.int32, fused.shape, 0)
    top = rows < c
    amp_b = jnp.where(top, fused, rolled)                   # amp in both halves
    pha_b = jnp.where(top, rolled, fused)                   # pha in both halves
    trig = jnp.where(top, jnp.cos(pha_b), jnp.sin(pha_b))
    eps = jnp.where(top, 2e-8, 1e-8)   # torch.complex(r,i)+1e-8 -> real gets 2e-8
    o_ref[...] = amp_b * trig + eps


def _post_kernel(x_ref, w_ref, b_ref, o_ref):
    # post(|irfft2(.)|): abs fused here, saving a full HBM read+write pass.
    o_ref[...] = _mm(w_ref[...], jnp.abs(x_ref[...])) + b_ref[...]


# ------------------------------------------------------------------ tiling --

def _tile_cap(budget_bytes, total_act_rows):
    """Largest tile width whose double-buffered f32 activations fit budget."""
    bytes_per_col = 2 * 4 * total_act_rows
    cap = budget_bytes // bytes_per_col
    return max(128, (cap // 128) * 128)


def _plan_axis(size, max_tile):
    """(padded_size, tile): pad to a multiple of 128 (lane-dense stores, real
    grid for pipelining) and pick the largest 128-multiple tile dividing it."""
    if size < 128:
        return size, size
    padded = ((size + 127) // 128) * 128
    tile = max(128, min(max_tile, padded))
    tile = (tile // 128) * 128
    while padded % tile != 0:
        tile -= 128
    return padded, tile


# ------------------------------------------------------------------ params --

def init_params(key, channels):
    """Init mimicking PyTorch Conv2d defaults (uniform +-1/sqrt(fan_in)), with
    the stacked / block-diagonal layout the kernels consume prebuilt once here
    (no per-call slicing or concatenation)."""
    def conv(k, out_c, in_c):
        kw, kb = jax.random.split(k)
        bound = float(in_c) ** -0.5
        w = jax.random.uniform(kw, (out_c, in_c), jnp.float32, -bound, bound)
        b = jax.random.uniform(kb, (out_c, 1), jnp.float32, -bound, bound)
        return w, b

    keys = jax.random.split(key, 7)
    c = channels
    z_cc = jnp.zeros((c, c), jnp.float32)
    z_c2c = jnp.zeros((c, 2 * c), jnp.float32)

    pre1_w, pre1_b = conv(keys[0], c, c)
    pre2_w, pre2_b = conv(keys[1], c, c)
    amp_w1, amp_b1 = conv(keys[2], c, 2 * c)
    amp_w2, amp_b2 = conv(keys[3], c, c)
    pha_w1, pha_b1 = conv(keys[4], c, 2 * c)
    pha_w2, pha_b2 = conv(keys[5], c, c)
    post_w, post_b = conv(keys[6], c, c)

    return {
        # pre stage: stacked [pre1 ; pre2] output rows
        'pre_w_ms':  jnp.concatenate([pre1_w, z_cc], axis=0),      # (2C, C)
        'pre_w_pan': jnp.concatenate([z_cc, pre2_w], axis=0),      # (2C, C)
        'pre_b':     jnp.concatenate([pre1_b, pre2_b], axis=0),    # (2C, 1)
        # fuse stage: rows [0,C) = amp branch, rows [C,2C) = pha branch
        'fuse_w1_amp': jnp.concatenate([amp_w1, z_c2c], axis=0),   # (2C, 2C)
        'fuse_w1_pha': jnp.concatenate([z_c2c, pha_w1], axis=0),   # (2C, 2C)
        'fuse_b1':     jnp.concatenate([amp_b1, pha_b1], axis=0),  # (2C, 1)
        'fuse_w2':     jnp.block([[amp_w2, z_cc], [z_cc, pha_w2]]),
        'fuse_b2':     jnp.concatenate([amp_b2, pha_b2], axis=0),
        # post stage
        'post_w': post_w,
        'post_b': post_b,
    }


# ----------------------------------------------------------------- forward --

def freprocess(msf, panf, params, *, tile_target=8192,
               act_vmem_budget=8 * 1024 * 1024):
    n, c, h, w = msf.shape
    c2 = 2 * c
    s = h * w
    wf = w // 2 + 1
    sf = h * wf

    cp = pltpu.CompilerParams(
        dimension_semantics=("parallel", "parallel"),   # megacore sharding
        vmem_limit_bytes=32 * 1024 * 1024)              # explicit: v5e/v6e/v7x safe

    def act(rows, tile):
        # lane-dense (rows, tile) blocks; batch dim squeezed out of the ref
        return pl.BlockSpec((None, rows, tile), lambda i, j: (i, 0, j))

    def const(shape):
        # weights / biases: constant index_map -> fetched once, VMEM-resident
        return pl.BlockSpec(shape, lambda i, j: (0, 0))

    def pad_to(x, size):
        if x.shape[-1] == size:
            return x
        return jnp.pad(x, ((0, 0), (0, 0), (0, size - x.shape[-1])))

    # --- pre1 / pre2 (1x1 convs), stacked [pre1(ms); pre2(pan)] output ------
    s_pad, ts = _plan_axis(s, min(tile_target,
                                  _tile_cap(act_vmem_budget, 4 * c)))
    ms_flat = pad_to(msf.reshape(n, c, s), s_pad)
    pan_flat = pad_to(panf.reshape(n, c, s), s_pad)
    pre_stack = pl.pallas_call(
        _pre_kernel,
        grid=(n, s_pad // ts),
        out_shape=jax.ShapeDtypeStruct((n, c2, s_pad), jnp.float32),
        in_specs=[act(c, ts), act(c, ts),
                  const((c2, c)), const((c2, c)), const((c2, 1))],
        out_specs=act(c2, ts),
        compiler_params=cp,
        cost_estimate=pl.CostEstimate(
            flops=8 * c * c * n * s_pad, transcendentals=0,
            bytes_accessed=16 * c * n * s_pad),
    )(ms_flat, pan_flat,
      params['pre_w_ms'], params['pre_w_pan'], params['pre_b'])

    # --- FFT + amp/phase extraction (single XLA pass over 2C channels) ------
    pre_img = pre_stack[:, :, :s].reshape(n, c2, h, w)
    F = jnp.fft.rfft2(pre_img, norm='backward')            # (n, 2C, h, wf) c64
    sf_pad, tsf = _plan_axis(sf, min(tile_target,
                                     _tile_cap(act_vmem_budget, 6 * c)))
    amp_cat = pad_to(jnp.abs(F).reshape(n, c2, sf), sf_pad)    # cat([ms,pan],C)
    pha_cat = pad_to(jnp.angle(F).reshape(n, c2, sf), sf_pad)

    # --- amp_fuse / pha_fuse + cos/sin recombination (stacked) --------------
    ri_stack = pl.pallas_call(
        _fuse_kernel,
        grid=(n, sf_pad // tsf),
        out_shape=jax.ShapeDtypeStruct((n, c2, sf_pad), jnp.float32),
        in_specs=[act(c2, tsf), act(c2, tsf),
                  const((c2, c2)), const((c2, c2)), const((c2, 1)),
                  const((c2, c2)), const((c2, 1))],
        out_specs=act(c2, tsf),
        compiler_params=cp,
        cost_estimate=pl.CostEstimate(
            flops=24 * c * c * n * sf_pad,
            transcendentals=4 * c * n * sf_pad,
            bytes_accessed=24 * c * n * sf_pad),
    )(amp_cat, pha_cat,
      params['fuse_w1_amp'], params['fuse_w1_pha'], params['fuse_b1'],
      params['fuse_w2'], params['fuse_b2'])

    real = ri_stack[:, :c, :sf].reshape(n, c, h, wf)
    imag = ri_stack[:, c:, :sf].reshape(n, c, h, wf)
    out = jnp.fft.irfft2(jax.lax.complex(real, imag), s=(h, w),
                         norm='backward')

    # --- post (1x1 conv, abs fused in-kernel) --------------------------------
    sp_pad, tsp = _plan_axis(s, min(tile_target,
                                    _tile_cap(act_vmem_budget, 2 * c)))
    out_flat = pad_to(out.reshape(n, c, s), sp_pad)
    res = pl.pallas_call(
        _post_kernel,
        grid=(n, sp_pad // tsp),
        out_shape=jax.ShapeDtypeStruct((n, c, sp_pad), jnp.float32),
        in_specs=[act(c, tsp), const((c, c)), const((c, 1))],
        out_specs=act(c, tsp),
        compiler_params=cp,
        cost_estimate=pl.CostEstimate(
            flops=2 * c * c * n * sp_pad, transcendentals=0,
            bytes_accessed=8 * c * n * sp_pad),
    )(out_flat, params['post_w'], params['post_b'])

    return res[:, :, :s].reshape(n, c, h, w)


# --------------------------------------------------------------- reference --

def _reference(msf, panf, params):
    """Pure-JAX port of the original PyTorch Freprocess forward (for checks)."""
    n, c, h, w = msf.shape

    def conv1x1(w_, b_, x):
        return jnp.einsum('oi,nihw->nohw', w_, x) + b_[None, :, :, None]

    def leaky(x):
        return jnp.where(x >= 0, x, 0.1 * x)

    pre1_w, pre1_b = params['pre_w_ms'][:c], params['pre_b'][:c]
    pre2_w, pre2_b = params['pre_w_pan'][c:], params['pre_b'][c:]
    amp_w1, amp_b1 = params['fuse_w1_amp'][:c], params['fuse_b1'][:c]
    pha_w1, pha_b1 = params['fuse_w1_pha'][c:], params['fuse_b1'][c:]
    amp_w2, amp_b2 = params['fuse_w2'][:c, :c], params['fuse_b2'][:c]
    pha_w2, pha_b2 = params['fuse_w2'][c:, c:], params['fuse_b2'][c:]

    msF = jnp.fft.rfft2(conv1x1(pre1_w, pre1_b, msf) + 1e-8, norm='backward')
    panF = jnp.fft.rfft2(conv1x1(pre2_w, pre2_b, panf) + 1e-8, norm='backward')
    amp_in = jnp.concatenate([jnp.abs(msF), jnp.abs(panF)], axis=1)
    pha_in = jnp.concatenate([jnp.angle(msF), jnp.angle(panF)], axis=1)
    amp_f = conv1x1(amp_w2, amp_b2, leaky(conv1x1(amp_w1, amp_b1, amp_in)))
    pha_f = conv1x1(pha_w2, pha_b2, leaky(conv1x1(pha_w1, pha_b1, pha_in)))
    real = amp_f * jnp.cos(pha_f) + 1e-8
    imag = amp_f * jnp.sin(pha_f) + 1e-8
    out_c = jax.lax.complex(real, imag) + 1e-8   # scalar eps lands on real part
    out = jnp.abs(jnp.fft.irfft2(out_c, s=(h, w), norm='backward'))
    return conv1x1(params['post_w'], params['post_b'], out)


# ------------------------------------------------------------------- main ---

if __name__ == "__main__":
    key = jax.random.PRNGKey(0)
    k_par, k_ms, k_pan = jax.random.split(key, 3)

    N, C, H, W = 2, 4, 16, 16
    params = init_params(k_par, C)
    msf = jax.random.normal(k_ms, (N, C, H, W), jnp.float32)
    panf = jax.random.normal(k_pan, (N, C, H, W), jnp.float32)

    out = jax.jit(freprocess)(msf, panf, params)
    jax.block_until_ready(out)
    assert out.shape == (N, C, H, W), out.shape

    ref = jax.jit(_reference)(msf, panf, params)
    jax.block_until_ready(ref)
    np.testing.assert_allclose(np.asarray(out), np.asarray(ref),
                               rtol=2e-3, atol=2e-3)
    print("KERNEL_OK")
</pallas_src>

<mosaic_0001>
module attributes {stable_mosaic.version = 11 : i64} {
  func.func @_pre_kernel(%arg0: i32, %arg1: i32, %arg2: memref<1x4x256xf32, #tpu.memory_space<vmem>>, %arg3: memref<1x4x256xf32, #tpu.memory_space<vmem>>, %arg4: memref<8x4xf32, #tpu.memory_space<vmem>>, %arg5: memref<8x4xf32, #tpu.memory_space<vmem>>, %arg6: memref<8x1xf32, #tpu.memory_space<vmem>>, %arg7: memref<1x8x256xf32, #tpu.memory_space<vmem>>) attributes {dimension_semantics = [#tpu.dimension_semantics<parallel>, #tpu.dimension_semantics<parallel>], iteration_bounds = array<i64: 2, 1>, scalar_prefetch = 0 : i64, scratch_operands = 0 : i64, tpu.core_type = #tpu.core_type<tc>, window_params = [{transform_indices = @transform_0, window_bounds = array<i64: 1, 4, 256>}, {transform_indices = @transform_1, window_bounds = array<i64: 1, 4, 256>}, {pipeline_mode = #tpu.pipeline_mode<synchronous>, transform_indices = @transform_2, window_bounds = array<i64: 8, 4>}, {pipeline_mode = #tpu.pipeline_mode<synchronous>, transform_indices = @transform_3, window_bounds = array<i64: 8, 4>}, {pipeline_mode = #tpu.pipeline_mode<synchronous>, transform_indices = @transform_4, window_bounds = array<i64: 8, 1>}, {transform_indices = @transform_5, window_bounds = array<i64: 1, 8, 256>}]} {
    %c0 = arith.constant 0 : index
    %c0_0 = arith.constant 0 : index
    %0 = vector.load %arg4[%c0, %c0_0] : memref<8x4xf32, #tpu.memory_space<vmem>>, vector<8x4xf32>
    %c0_1 = arith.constant 0 : index
    %c0_2 = arith.constant 0 : index
    %c0_3 = arith.constant 0 : index
    %1 = vector.load %arg2[%c0_1, %c0_2, %c0_3] : memref<1x4x256xf32, #tpu.memory_space<vmem>>, vector<1x4x256xf32>
    %2 = vector.shape_cast %1 : vector<1x4x256xf32> to vector<4x256xf32>
    %3 = vector.extract_strided_slice %0 {offsets = [0, 0], sizes = [8, 1], strides = [1, 1]} : vector<8x4xf32> to vector<8x1xf32>
    %4 = vector.extract_strided_slice %2 {offsets = [0, 0], sizes = [1, 256], strides = [1, 1]} : vector<4x256xf32> to vector<1x256xf32>
    %5 = vector.broadcast %3 : vector<8x1xf32> to vector<8x256xf32>
    %6 = vector.broadcast %4 : vector<1x256xf32> to vector<8x256xf32>
    %7 = arith.mulf %5, %6 : vector<8x256xf32>
    %8 = vector.extract_strided_slice %0 {offsets = [0, 1], sizes = [8, 1], strides = [1, 1]} : vector<8x4xf32> to vector<8x1xf32>
    %9 = vector.extract_strided_slice %2 {offsets = [1, 0], sizes = [1, 256], strides = [1, 1]} : vector<4x256xf32> to vector<1x256xf32>
    %10 = vector.broadcast %8 : vector<8x1xf32> to vector<8x256xf32>
    %11 = vector.broadcast %9 : vector<1x256xf32> to vector<8x256xf32>
    %12 = arith.mulf %10, %11 : vector<8x256xf32>
    %13 = arith.addf %7, %12 : vector<8x256xf32>
    %14 = vector.extract_strided_slice %0 {offsets = [0, 2], sizes = [8, 1], strides = [1, 1]} : vector<8x4xf32> to vector<8x1xf32>
    %15 = vector.extract_strided_slice %2 {offsets = [2, 0], sizes = [1, 256], strides = [1, 1]} : vector<4x256xf32> to vector<1x256xf32>
    %16 = vector.broadcast %14 : vector<8x1xf32> to vector<8x256xf32>
    %17 = vector.broadcast %15 : vector<1x256xf32> to vector<8x256xf32>
    %18 = arith.mulf %16, %17 : vector<8x256xf32>
    %19 = arith.addf %13, %18 : vector<8x256xf32>
    %20 = vector.extract_strided_slice %0 {offsets = [0, 3], sizes = [8, 1], strides = [1, 1]} : vector<8x4xf32> to vector<8x1xf32>
    %21 = vector.extract_strided_slice %2 {offsets = [3, 0], sizes = [1, 256], strides = [1, 1]} : vector<4x256xf32> to vector<1x256xf32>
    %22 = vector.broadcast %20 : vector<8x1xf32> to vector<8x256xf32>
    %23 = vector.broadcast %21 : vector<1x256xf32> to vector<8x256xf32>
    %24 = arith.mulf %22, %23 : vector<8x256xf32>
    %25 = arith.addf %19, %24 : vector<8x256xf32>
    %c0_4 = arith.constant 0 : index
    %c0_5 = arith.constant 0 : index
    %26 = vector.load %arg5[%c0_4, %c0_5] : memref<8x4xf32, #tpu.memory_space<vmem>>, vector<8x4xf32>
    %c0_6 = arith.constant 0 : index
    %c0_7 = arith.constant 0 : index
    %c0_8 = arith.constant 0 : index
    %27 = vector.load %arg3[%c0_6, %c0_7, %c0_8] : memref<1x4x256xf32, #tpu.memory_space<vmem>>, vector<1x4x256xf32>
    %28 = vector.shape_cast %27 : vector<1x4x256xf32> to vector<4x256xf32>
    %29 = vector.extract_strided_slice %26 {offsets = [0, 0], sizes = [8, 1], strides = [1, 1]} : vector<8x4xf32> to vector<8x1xf32>
    %30 = vector.extract_strided_slice %28 {offsets = [0, 0], sizes = [1, 256], strides = [1, 1]} : vector<4x256xf32> to vector<1x256xf32>
    %31 = vector.broadcast %29 : vector<8x1xf32> to vector<8x256xf32>
    %32 = vector.broadcast %30 : vector<1x256xf32> to vector<8x256xf32>
    %33 = arith.mulf %31, %32 : vector<8x256xf32>
    %34 = vector.extract_strided_slice %26 {offsets = [0, 1], sizes = [8, 1], strides = [1, 1]} : vector<8x4xf32> to vector<8x1xf32>
    %35 = vector.extract_strided_slice %28 {offsets = [1, 0], sizes = [1, 256], strides = [1, 1]} : vector<4x256xf32> to vector<1x256xf32>
    %36 = vector.broadcast %34 : vector<8x1xf32> to vector<8x256xf32>
    %37 = vector.broadcast %35 : vector<1x256xf32> to vector<8x256xf32>
    %38 = arith.mulf %36, %37 : vector<8x256xf32>
    %39 = arith.addf %33, %38 : vector<8x256xf32>
    %40 = vector.extract_strided_slice %26 {offsets = [0, 2], sizes = [8, 1], strides = [1, 1]} : vector<8x4xf32> to vector<8x1xf32>
    %41 = vector.extract_strided_slice %28 {offsets = [2, 0], sizes = [1, 256], strides = [1, 1]} : vector<4x256xf32> to vector<1x256xf32>
    %42 = vector.broadcast %40 : vector<8x1xf32> to vector<8x256xf32>
    %43 = vector.broadcast %41 : vector<1x256xf32> to vector<8x256xf32>
    %44 = arith.mulf %42, %43 : vector<8x256xf32>
    %45 = arith.addf %39, %44 : vector<8x256xf32>
    %46 = vector.extract_strided_slice %26 {offsets = [0, 3], sizes = [8, 1], strides = [1, 1]} : vector<8x4xf32> to vector<8x1xf32>
    %47 = vector.extract_strided_slice %28 {offsets = [3, 0], sizes = [1, 256], strides = [1, 1]} : vector<4x256xf32> to vector<1x256xf32>
    %48 = vector.broadcast %46 : vector<8x1xf32> to vector<8x256xf32>
    %49 = vector.broadcast %47 : vector<1x256xf32> to vector<8x256xf32>
    %50 = arith.mulf %48, %49 : vector<8x256xf32>
    %51 = arith.addf %45, %50 : vector<8x256xf32>
    %52 = arith.addf %25, %51 : vector<8x256xf32>
    %c0_9 = arith.constant 0 : index
    %c0_10 = arith.constant 0 : index
    %53 = vector.load %arg6[%c0_9, %c0_10] : memref<8x1xf32, #tpu.memory_space<vmem>>, vector<8x1xf32>
    %54 = vector.broadcast %53 : vector<8x1xf32> to vector<8x256xf32>
    %55 = arith.addf %52, %54 : vector<8x256xf32>
    %cst = arith.constant 9.99999993E-9 : f32
    %56 = vector.broadcast %cst : f32 to vector<8x256xf32>
    %57 = arith.addf %55, %56 : vector<8x256xf32>
    %c0_11 = arith.constant 0 : index
    %c0_12 = arith.constant 0 : index
    %c0_13 = arith.constant 0 : index
    %58 = vector.load %arg7[%c0_11, %c0_12, %c0_13] : memref<1x8x256xf32, #tpu.memory_space<vmem>>, vector<1x8x256xf32>
    %59 = vector.shape_cast %58 : vector<1x8x256xf32> to vector<8x256xf32>
    %60 = vector.shape_cast %57 : vector<8x256xf32> to vector<1x8x256xf32>
    tpu.vector_store %arg7[%c0_11, %c0_12, %c0_13], %60 {strides = array<i32>} : memref<1x8x256xf32, #tpu.memory_space<vmem>>, vector<1x8x256xf32>,
    return
  }
  func.func @transform_0(%arg0: i32, %arg1: i32) -> (i32, i32, i32) {
    %c0_i32 = arith.constant 0 : i32
    %c0_i32_0 = arith.constant 0 : i32
    return %arg0, %c0_i32, %arg1 : i32, i32, i32
  }
  func.func @transform_1(%arg0: i32, %arg1: i32) -> (i32, i32, i32) {
    %c0_i32 = arith.constant 0 : i32
    %c0_i32_0 = arith.constant 0 : i32
    return %arg0, %c0_i32, %arg1 : i32, i32, i32
  }
  func.func @transform_2(%arg0: i32, %arg1: i32) -> (i32, i32) {
    %c0_i32 = arith.constant 0 : i32
    %c0_i32_0 = arith.constant 0 : i32
    %c0_i32_1 = arith.constant 0 : i32
    return %c0_i32, %c0_i32_0 : i32, i32
  }
  func.func @transform_3(%arg0: i32, %arg1: i32) -> (i32, i32) {
    %c0_i32 = arith.constant 0 : i32
    %c0_i32_0 = arith.constant 0 : i32
    %c0_i32_1 = arith.constant 0 : i32
    return %c0_i32, %c0_i32_0 : i32, i32
  }
  func.func @transform_4(%arg0: i32, %arg1: i32) -> (i32, i32) {
    %c0_i32 = arith.constant 0 : i32
    %c0_i32_0 = arith.constant 0 : i32
    %c0_i32_1 = arith.constant 0 : i32
    return %c0_i32, %c0_i32_0 : i32, i32
  }
  func.func @transform_5(%arg0: i32, %arg1: i32) -> (i32, i32, i32) {
    %c0_i32 = arith.constant 0 : i32
    %c0_i32_0 = arith.constant 0 : i32
    return %arg0, %c0_i32, %arg1 : i32, i32, i32
  }
}

module attributes {stable_mosaic.version = 11 : i64} {
  func.func @_fuse_kernel(%arg0: i32, %arg1: i32, %arg2: memref<1x8x256xf32, #tpu.memory_space<vmem>>, %arg3: memref<1x8x256xf32, #tpu.memory_space<vmem>>, %arg4: memref<8x8xf32, #tpu.memory_space<vmem>>, %arg5: memref<8x8xf32, #tpu.memory_space<vmem>>, %arg6: memref<8x1xf32, #tpu.memory_space<vmem>>, %arg7: memref<8x8xf32, #tpu.memory_space<vmem>>, %arg8: memref<8x1xf32, #tpu.memory_space<vmem>>, %arg9: memref<1x8x256xf32, #tpu.memory_space<vmem>>) attributes {dimension_semantics = [#tpu.dimension_semantics<parallel>, #tpu.dimension_semantics<parallel>], iteration_bounds = array<i64: 2, 1>, scalar_prefetch = 0 : i64, scratch_operands = 0 : i64, tpu.core_type = #tpu.core_type<tc>, window_params = [{transform_indices = @transform_0, window_bounds = array<i64: 1, 8, 256>}, {transform_indices = @transform_1, window_bounds = array<i64: 1, 8, 256>}, {pipeline_mode = #tpu.pipeline_mode<synchronous>, transform_indices = @transform_2, window_bounds = array<i64: 8, 8>}, {pipeline_mode = #tpu.pipeline_mode<synchronous>, transform_indices = @transform_3, window_bounds = array<i64: 8, 8>}, {pipeline_mode = #tpu.pipeline_mode<synchronous>, transform_indices = @transform_4, window_bounds = array<i64: 8, 1>}, {pipeline_mode = #tpu.pipeline_mode<synchronous>, transform_indices = @transform_5, window_bounds = array<i64: 8, 8>}, {pipeline_mode = #tpu.pipeline_mode<synchronous>, transform_indices = @transform_6, window_bounds = array<i64: 8, 1>}, {transform_indices = @transform_7, window_bounds = array<i64: 1, 8, 256>}]} {
    %c0 = arith.constant 0 : index
    %c0_0 = arith.constant 0 : index
    %0 = vector.load %arg4[%c0, %c0_0] : memref<8x8xf32, #tpu.memory_space<vmem>>, vector<8x8xf32>
    %c0_1 = arith.constant 0 : index
    %c0_2 = arith.constant 0 : index
    %c0_3 = arith.constant 0 : index
    %1 = vector.load %arg2[%c0_1, %c0_2, %c0_3] : memref<1x8x256xf32, #tpu.memory_space<vmem>>, vector<1x8x256xf32>
    %2 = vector.shape_cast %1 : vector<1x8x256xf32> to vector<8x256xf32>
    %3 = vector.extract_strided_slice %0 {offsets = [0, 0], sizes = [8, 1], strides = [1, 1]} : vector<8x8xf32> to vector<8x1xf32>
    %4 = vector.extract_strided_slice %2 {offsets = [0, 0], sizes = [1, 256], strides = [1, 1]} : vector<8x256xf32> to vector<1x256xf32>
    %5 = vector.broadcast %3 : vector<8x1xf32> to vector<8x256xf32>
    %6 = vector.broadcast %4 : vector<1x256xf32> to vector<8x256xf32>
    %7 = arith.mulf %5, %6 : vector<8x256xf32>
    %8 = vector.extract_strided_slice %0 {offsets = [0, 1], sizes = [8, 1], strides = [1, 1]} : vector<8x8xf32> to vector<8x1xf32>
    %9 = vector.extract_strided_slice %2 {offsets = [1, 0], sizes = [1, 256], strides = [1, 1]} : vector<8x256xf32> to vector<1x256xf32>
    %10 = vector.broadcast %8 : vector<8x1xf32> to vector<8x256xf32>
    %11 = vector.broadcast %9 : vector<1x256xf32> to vector<8x256xf32>
    %12 = arith.mulf %10, %11 : vector<8x256xf32>
    %13 = arith.addf %7, %12 : vector<8x256xf32>
    %14 = vector.extract_strided_slice %0 {offsets = [0, 2], sizes = [8, 1], strides = [1, 1]} : vector<8x8xf32> to vector<8x1xf32>
    %15 = vector.extract_strided_slice %2 {offsets = [2, 0], sizes = [1, 256], strides = [1, 1]} : vector<8x256xf32> to vector<1x256xf32>
    %16 = vector.broadcast %14 : vector<8x1xf32> to vector<8x256xf32>
    %17 = vector.broadcast %15 : vector<1x256xf32> to vector<8x256xf32>
    %18 = arith.mulf %16, %17 : vector<8x256xf32>
    %19 = arith.addf %13, %18 : vector<8x256xf32>
    %20 = vector.extract_strided_slice %0 {offsets = [0, 3], sizes = [8, 1], strides = [1, 1]} : vector<8x8xf32> to vector<8x1xf32>
    %21 = vector.extract_strided_slice %2 {offsets = [3, 0], sizes = [1, 256], strides = [1, 1]} : vector<8x256xf32> to vector<1x256xf32>
    %22 = vector.broadcast %20 : vector<8x1xf32> to vector<8x256xf32>
    %23 = vector.broadcast %21 : vector<1x256xf32> to vector<8x256xf32>
    %24 = arith.mulf %22, %23 : vector<8x256xf32>
    %25 = arith.addf %19, %24 : vector<8x256xf32>
    %26 = vector.extract_strided_slice %0 {offsets = [0, 4], sizes = [8, 1], strides = [1, 1]} : vector<8x8xf32> to vector<8x1xf32>
    %27 = vector.extract_strided_slice %2 {offsets = [4, 0], sizes = [1, 256], strides = [1, 1]} : vector<8x256xf32> to vector<1x256xf32>
    %28 = vector.broadcast %26 : vector<8x1xf32> to vector<8x256xf32>
    %29 = vector.broadcast %27 : vector<1x256xf32> to vector<8x256xf32>
    %30 = arith.mulf %28, %29 : vector<8x256xf32>
    %31 = arith.addf %25, %30 : vector<8x256xf32>
    %32 = vector.extract_strided_slice %0 {offsets = [0, 5], sizes = [8, 1], strides = [1, 1]} : vector<8x8xf32> to vector<8x1xf32>
    %33 = vector.extract_strided_slice %2 {offsets = [5, 0], sizes = [1, 256], strides = [1, 1]} : vector<8x256xf32> to vector<1x256xf32>
    %34 = vector.broadcast %32 : vector<8x1xf32> to vector<8x256xf32>
    %35 = vector.broadcast %33 : vector<1x256xf32> to vector<8x256xf32>
    %36 = arith.mulf %34, %35 : vector<8x256xf32>
    %37 = arith.addf %31, %36 : vector<8x256xf32>
    %38 = vector.extract_strided_slice %0 {offsets = [0, 6], sizes = [8, 1], strides = [1, 1]} : vector<8x8xf32> to vector<8x1xf32>
    %39 = vector.extract_strided_slice %2 {offsets = [6, 0], sizes = [1, 256], strides = [1, 1]} : vector<8x256xf32> to vector<1x256xf32>
    %40 = vector.broadcast %38 : vector<8x1xf32> to vector<8x256xf32>
    %41 = vector.broadcast %39 : vector<1x256xf32> to vector<8x256xf32>
    %42 = arith.mulf %40, %41 : vector<8x256xf32>
    %43 = arith.addf %37, %42 : vector<8x256xf32>
    %44 = vector.extract_strided_slice %0 {offsets = [0, 7], sizes = [8, 1], strides = [1, 1]} : vector<8x8xf32> to vector<8x1xf32>
    %45 = vector.extract_strided_slice %2 {offsets = [7, 0], sizes = [1, 256], strides = [1, 1]} : vector<8x256xf32> to vector<1x256xf32>
    %46 = vector.broadcast %44 : vector<8x1xf32> to vector<8x256xf32>
    %47 = vector.broadcast %45 : vector<1x256xf32> to vector<8x256xf32>
    %48 = arith.mulf %46, %47 : vector<8x256xf32>
    %49 = arith.addf %43, %48 : vector<8x256xf32>
    %c0_4 = arith.constant 0 : index
    %c0_5 = arith.constant 0 : index
    %50 = vector.load %arg5[%c0_4, %c0_5] : memref<8x8xf32, #tpu.memory_space<vmem>>, vector<8x8xf32>
    %c0_6 = arith.constant 0 : index
    %c0_7 = arith.constant 0 : index
    %c0_8 = arith.constant 0 : index
    %51 = vector.load %arg3[%c0_6, %c0_7, %c0_8] : memref<1x8x256xf32, #tpu.memory_space<vmem>>, vector<1x8x256xf32>
    %52 = vector.shape_cast %51 : vector<1x8x256xf32> to vector<8x256xf32>
    %53 = vector.extract_strided_slice %50 {offsets = [0, 0], sizes = [8, 1], strides = [1, 1]} : vector<8x8xf32> to vector<8x1xf32>
    %54 = vector.extract_strided_slice %52 {offsets = [0, 0], sizes = [1, 256], strides = [1, 1]} : vector<8x256xf32> to vector<1x256xf32>
    %55 = vector.broadcast %53 : vector<8x1xf32> to vector<8x256xf32>
    %56 = vector.broadcast %54 : vector<1x256xf32> to vector<8x256xf32>
    %57 = arith.mulf %55, %56 : vector<8x256xf32>
    %58 = vector.extract_strided_slice %50 {offsets = [0, 1], sizes = [8, 1], strides = [1, 1]} : vector<8x8xf32> to vector<8x1xf32>
    %59 = vector.extract_strided_slice %52 {offsets = [1, 0], sizes = [1, 256], strides = [1, 1]} : vector<8x256xf32> to vector<1x256xf32>
    %60 = vector.broadcast %58 : vector<8x1xf32> to vector<8x256xf32>
    %61 = vector.broadcast %59 : vector<1x256xf32> to vector<8x256xf32>
    %62 = arith.mulf %60, %61 : vector<8x256xf32>
    %63 = arith.addf %57, %62 : vector<8x256xf32>
    %64 = vector.extract_strided_slice %50 {offsets = [0, 2], sizes = [8, 1], strides = [1, 1]} : vector<8x8xf32> to vector<8x1xf32>
    %65 = vector.extract_strided_slice %52 {offsets = [2, 0], sizes = [1, 256], strides = [1, 1]} : vector<8x256xf32> to vector<1x256xf32>
    %66 = vector.broadcast %64 : vector<8x1xf32> to vector<8x256xf32>
    %67 = vector.broadcast %65 : vector<1x256xf32> to vector<8x256xf32>
    %68 = arith.mulf %66, %67 : vector<8x256xf32>
    %69 = arith.addf %63, %68 : vector<8x256xf32>
    %70 = vector.extract_strided_slice %50 {offsets = [0, 3], sizes = [8, 1], strides = [1, 1]} : vector<8x8xf32> to vector<8x1xf32>
    %71 = vector.extract_strided_slice %52 {offsets = [3, 0], sizes = [1, 256], strides = [1, 1]} : vector<8x256xf32> to vector<1x256xf32>
    %72 = vector.broadcast %70 : vector<8x1xf32> to vector<8x256xf32>
    %73 = vector.broadcast %71 : vector<1x256xf32> to vector<8x256xf32>
    %74 = arith.mulf %72, %73 : vector<8x256xf32>
    %75 = arith.addf %69, %74 : vector<8x256xf32>
    %76 = vector.extract_strided_slice %50 {offsets = [0, 4], sizes = [8, 1], strides = [1, 1]} : vector<8x8xf32> to vector<8x1xf32>
    %77 = vector.extract_strided_slice %52 {offsets = [4, 0], sizes = [1, 256], strides = [1, 1]} : vector<8x256xf32> to vector<1x256xf32>
    %78 = vector.broadcast %76 : vector<8x1xf32> to vector<8x256xf32>
    %79 = vector.broadcast %77 : vector<1x256xf32> to vector<8x256xf32>
    %80 = arith.mulf %78, %79 : vector<8x256xf32>
    %81 = arith.addf %75, %80 : vector<8x256xf32>
    %82 = vector.extract_strided_slice %50 {offsets = [0, 5], sizes = [8, 1], strides = [1, 1]} : vector<8x8xf32> to vector<8x1xf32>
    %83 = vector.extract_strided_slice %52 {offsets = [5, 0], sizes = [1, 256], strides = [1, 1]} : vector<8x256xf32> to vector<1x256xf32>
    %84 = vector.broadcast %82 : vector<8x1xf32> to vector<8x256xf32>
    %85 = vector.broadcast %83 : vector<1x256xf32> to vector<8x256xf32>
    %86 = arith.mulf %84, %85 : vector<8x256xf32>
    %87 = arith.addf %81, %86 : vector<8x256xf32>
    %88 = vector.extract_strided_slice %50 {offsets = [0, 6], sizes = [8, 1], strides = [1, 1]} : vector<8x8xf32> to vector<8x1xf32>
    %89 = vector.extract_strided_slice %52 {offsets = [6, 0], sizes = [1, 256], strides = [1, 1]} : vector<8x256xf32> to vector<1x256xf32>
    %90 = vector.broadcast %88 : vector<8x1xf32> to vector<8x256xf32>
    %91 = vector.broadcast %89 : vector<1x256xf32> to vector<8x256xf32>
    %92 = arith.mulf %90, %91 : vector<8x256xf32>
    %93 = arith.addf %87, %92 : vector<8x256xf32>
    %94 = vector.extract_strided_slice %50 {offsets = [0, 7], sizes = [8, 1], strides = [1, 1]} : vector<8x8xf32> to vector<8x1xf32>
    %95 = vector.extract_strided_slice %52 {offsets = [7, 0], sizes = [1, 256], strides = [1, 1]} : vector<8x256xf32> to vector<1x256xf32>
    %96 = vector.broadcast %94 : vector<8x1xf32> to vector<8x256xf32>
    %97 = vector.broadcast %95 : vector<1x256xf32> to vector<8x256xf32>
    %98 = arith.mulf %96, %97 : vector<8x256xf32>
    %99 = arith.addf %93, %98 : vector<8x256xf32>
    %100 = arith.addf %49, %99 : vector<8x256xf32>
    %c0_9 = arith.constant 0 : index
    %c0_10 = arith.constant 0 : index
    %101 = vector.load %arg6[%c0_9, %c0_10] : memref<8x1xf32, #tpu.memory_space<vmem>>, vector<8x1xf32>
    %102 = vector.broadcast %101 : vector<8x1xf32> to vector<8x256xf32>
    %103 = arith.addf %100, %102 : vector<8x256xf32>
    %cst = arith.constant 0.000000e+00 : f32
    %104 = vector.broadcast %cst : f32 to vector<8x256xf32>
    %105 = arith.cmpf oge, %103, %104 : vector<8x256xf32>
    %cst_11 = arith.constant 1.000000e-01 : f32
    %106 = vector.broadcast %cst_11 : f32 to vector<8x256xf32>
    %107 = arith.mulf %106, %103 : vector<8x256xf32>
    %108 = arith.select %105, %103, %107 : vector<8x256xi1>, vector<8x256xf32>
    %c0_12 = arith.constant 0 : index
    %c0_13 = arith.constant 0 : index
    %109 = vector.load %arg7[%c0_12, %c0_13] : memref<8x8xf32, #tpu.memory_space<vmem>>, vector<8x8xf32>
    %110 = vector.extract_strided_slice %109 {offsets = [0, 0], sizes = [8, 1], strides = [1, 1]} : vector<8x8xf32> to vector<8x1xf32>
    %111 = vector.extract_strided_slice %108 {offsets = [0, 0], sizes = [1, 256], strides = [1, 1]} : vector<8x256xf32> to vector<1x256xf32>
    %112 = vector.broadcast %110 : vector<8x1xf32> to vector<8x256xf32>
    %113 = vector.broadcast %111 : vector<1x256xf32> to vector<8x256xf32>
    %114 = arith.mulf %112, %113 : vector<8x256xf32>
    %115 = vector.extract_strided_slice %109 {offsets = [0, 1], sizes = [8, 1], strides = [1, 1]} : vector<8x8xf32> to vector<8x1xf32>
    %116 = vector.extract_strided_slice %108 {offsets = [1, 0], sizes = [1, 256], strides = [1, 1]} : vector<8x256xf32> to vector<1x256xf32>
    %117 = vector.broadcast %115 : vector<8x1xf32> to vector<8x256xf32>
    %118 = vector.broadcast %116 : vector<1x256xf32> to vector<8x256xf32>
    %119 = arith.mulf %117, %118 : vector<8x256xf32>
    %120 = arith.addf %114, %119 : vector<8x256xf32>
    %121 = vector.extract_strided_slice %109 {offsets = [0, 2], sizes = [8, 1], strides = [1, 1]} : vector<8x8xf32> to vector<8x1xf32>
    %122 = vector.extract_strided_slice %108 {offsets = [2, 0], sizes = [1, 256], strides = [1, 1]} : vector<8x256xf32> to vector<1x256xf32>
    %123 = vector.broadcast %121 : vector<8x1xf32> to vector<8x256xf32>
    %124 = vector.broadcast %122 : vector<1x256xf32> to vector<8x256xf32>
    %125 = arith.mulf %123, %124 : vector<8x256xf32>
    %126 = arith.addf %120, %125 : vector<8x256xf32>
    %127 = vector.extract_strided_slice %109 {offsets = [0, 3], sizes = [8, 1], strides = [1, 1]} : vector<8x8xf32> to vector<8x1xf32>
    %128 = vector.extract_strided_slice %108 {offsets = [3, 0], sizes = [1, 256], strides = [1, 1]} : vector<8x256xf32> to vector<1x256xf32>
    %129 = vector.broadcast %127 : vector<8x1xf32> to vector<8x256xf32>
    %130 = vector.broadcast %128 : vector<1x256xf32> to vector<8x256xf32>
    %131 = arith.mulf %129, %130 : vector<8x256xf32>
    %132 = arith.addf %126, %131 : vector<8x256xf32>
    %133 = vector.extract_strided_slice %109 {offsets = [0, 4], sizes = [8, 1], strides = [1, 1]} : vector<8x8xf32> to vector<8x1xf32>
    %134 = vector.extract_strided_slice %108 {offsets = [4, 0], sizes = [1, 256], strides = [1, 1]} : vector<8x256xf32> to vector<1x256xf32>
    %135 = vector.broadcast %133 : vector<8x1xf32> to vector<8x256xf32>
    %136 = vector.broadcast %134 : vector<1x256xf32> to vector<8x256xf32>
    %137 = arith.mulf %135, %136 : vector<8x256xf32>
    %138 = arith.addf %132, %137 : vector<8x256xf32>
    %139 = vector.extract_strided_slice %109 {offsets = [0, 5], sizes = [8, 1], strides = [1, 1]} : vector<8x8xf32> to vector<8x1xf32>
    %140 = vector.extract_strided_slice %108 {offsets = [5, 0], sizes = [1, 256], strides = [1, 1]} : vector<8x256xf32> to vector<1x256xf32>
    %141 = vector.broadcast %139 : vector<8x1xf32> to vector<8x256xf32>
    %142 = vector.broadcast %140 : vector<1x256xf32> to vector<8x256xf32>
    %143 = arith.mulf %141, %142 : vector<8x256xf32>
    %144 = arith.addf %138, %143 : vector<8x256xf32>
    %145 = vector.extract_strided_slice %109 {offsets = [0, 6], sizes = [8, 1], strides = [1, 1]} : vector<8x8xf32> to vector<8x1xf32>
    %146 = vector.extract_strided_slice %108 {offsets = [6, 0], sizes = [1, 256], strides = [1, 1]} : vector<8x256xf32> to vector<1x256xf32>
    %147 = vector.broadcast %145 : vector<8x1xf32> to vector<8x256xf32>
    %148 = vector.broadcast %146 : vector<1x256xf32> to vector<8x256xf32>
    %149 = arith.mulf %147, %148 : vector<8x256xf32>
    %150 = arith.addf %144, %149 : vector<8x256xf32>
    %151 = vector.extract_strided_slice %109 {offsets = [0, 7], sizes = [8, 1], strides = [1, 1]} : vector<8x8xf32> to vector<8x1xf32>
    %152 = vector.extract_strided_slice %108 {offsets = [7, 0], sizes = [1, 256], strides = [1, 1]} : vector<8x256xf32> to vector<1x256xf32>
    %153 = vector.broadcast %151 : vector<8x1xf32> to vector<8x256xf32>
    %154 = vector.broadcast %152 : vector<1x256xf32> to vector<8x256xf32>
    %155 = arith.mulf %153, %154 : vector<8x256xf32>
    %156 = arith.addf %150, %155 : vector<8x256xf32>
    %c0_14 = arith.constant 0 : index
    %c0_15 = arith.constant 0 : index
    %157 = vector.load %arg8[%c0_14, %c0_15] : memref<8x1xf32, #tpu.memory_space<vmem>>, vector<8x1xf32>
    %158 = vector.broadcast %157 : vector<8x1xf32> to vector<8x256xf32>
    %159 = arith.addf %156, %158 : vector<8x256xf32>
    %c4_i32 = arith.constant 4 : i32
    %160 = tpu.dynamic_rotate %159 by %c4_i32 dim 0 : vector<8x256xf32>, i32 -> vector<8x256xf32>
    %161 = tpu.iota {dimensions = array<i32: 0>} : vector<8x256xi32>
    %c4_i32_16 = arith.constant 4 : i32
    %162 = vector.broadcast %c4_i32_16 : i32 to vector<8x256xi32>
    %163 = arith.cmpi slt, %161, %162 : vector<8x256xi32>
    %164 = arith.select %163, %159, %160 : vector<8x256xi1>, vector<8x256xf32>
    %165 = arith.select %163, %160, %159 : vector<8x256xi1>, vector<8x256xf32>
    %166 = math.cos %165 : vector<8x256xf32>
    %167 = math.sin %165 : vector<8x256xf32>
    %168 = arith.select %163, %166, %167 : vector<8x256xi1>, vector<8x256xf32>
    %cst_17 = arith.constant 2.000000e-08 : f32
    %cst_18 = arith.constant 9.99999993E-9 : f32
    %169 = vector.broadcast %cst_17 : f32 to vector<8x256xf32>
    %170 = vector.broadcast %cst_18 : f32 to vector<8x256xf32>
    %171 = arith.select %163, %169, %170 : vector<8x256xi1>, vector<8x256xf32>
    %172 = arith.mulf %164, %168 : vector<8x256xf32>
    %173 = arith.addf %172, %171 : vector<8x256xf32>
    %c0_19 = arith.constant 0 : index
    %c0_20 = arith.constant 0 : index
    %c0_21 = arith.constant 0 : index
    %174 = vector.load %arg9[%c0_19, %c0_20, %c0_21] : memref<1x8x256xf32, #tpu.memory_space<vmem>>, vector<1x8x256xf32>
    %175 = vector.shape_cast %174 : vector<1x8x256xf32> to vector<8x256xf32>
    %176 = vector.shape_cast %173 : vector<8x256xf32> to vector<1x8x256xf32>
    tpu.vector_store %arg9[%c0_19, %c0_20, %c0_21], %176 {strides = array<i32>} : memref<1x8x256xf32, #tpu.memory_space<vmem>>, vector<1x8x256xf32>,
    return
  }
  func.func @transform_0(%arg0: i32, %arg1: i32) -> (i32, i32, i32) {
    %c0_i32 = arith.constant 0 : i32
    %c0_i32_0 = arith.constant 0 : i32
    return %arg0, %c0_i32, %arg1 : i32, i32, i32
  }
  func.func @transform_1(%arg0: i32, %arg1: i32) -> (i32, i32, i32) {
    %c0_i32 = arith.constant 0 : i32
    %c0_i32_0 = arith.constant 0 : i32
    return %arg0, %c0_i32, %arg1 : i32, i32, i32
  }
  func.func @transform_2(%arg0: i32, %arg1: i32) -> (i32, i32) {
    %c0_i32 = arith.constant 0 : i32
    %c0_i32_0 = arith.constant 0 : i32
    %c0_i32_1 = arith.constant 0 : i32
    return %c0_i32, %c0_i32_0 : i32, i32
  }
  func.func @transform_3(%arg0: i32, %arg1: i32) -> (i32, i32) {
    %c0_i32 = arith.constant 0 : i32
    %c0_i32_0 = arith.constant 0 : i32
    %c0_i32_1 = arith.constant 0 : i32
    return %c0_i32, %c0_i32_0 : i32, i32
  }
  func.func @transform_4(%arg0: i32, %arg1: i32) -> (i32, i32) {
    %c0_i32 = arith.constant 0 : i32
    %c0_i32_0 = arith.constant 0 : i32
    %c0_i32_1 = arith.constant 0 : i32
    return %c0_i32, %c0_i32_0 : i32, i32
  }
  func.func @transform_5(%arg0: i32, %arg1: i32) -> (i32, i32) {
    %c0_i32 = arith.constant 0 : i32
    %c0_i32_0 = arith.constant 0 : i32
    %c0_i32_1 = arith.constant 0 : i32
    return %c0_i32, %c0_i32_0 : i32, i32
  }
  func.func @transform_6(%arg0: i32, %arg1: i32) -> (i32, i32) {
    %c0_i32 = arith.constant 0 : i32
    %c0_i32_0 = arith.constant 0 : i32
    %c0_i32_1 = arith.constant 0 : i32
    return %c0_i32, %c0_i32_0 : i32, i32
  }
  func.func @transform_7(%arg0: i32, %arg1: i32) -> (i32, i32, i32) {
    %c0_i32 = arith.constant 0 : i32
    %c0_i32_0 = arith.constant 0 : i32
    return %arg0, %c0_i32, %arg1 : i32, i32, i32
  }
}

module attributes {stable_mosaic.version = 11 : i64} {
  func.func @_post_kernel(%arg0: i32, %arg1: i32, %arg2: memref<1x4x256xf32, #tpu.memory_space<vmem>>, %arg3: memref<4x4xf32, #tpu.memory_space<vmem>>, %arg4: memref<4x1xf32, #tpu.memory_space<vmem>>, %arg5: memref<1x4x256xf32, #tpu.memory_space<vmem>>) attributes {dimension_semantics = [#tpu.dimension_semantics<parallel>, #tpu.dimension_semantics<parallel>], iteration_bounds = array<i64: 2, 1>, scalar_prefetch = 0 : i64, scratch_operands = 0 : i64, tpu.core_type = #tpu.core_type<tc>, window_params = [{transform_indices = @transform_0, window_bounds = array<i64: 1, 4, 256>}, {pipeline_mode = #tpu.pipeline_mode<synchronous>, transform_indices = @transform_1, window_bounds = array<i64: 4, 4>}, {pipeline_mode = #tpu.pipeline_mode<synchronous>, transform_indices = @transform_2, window_bounds = array<i64: 4, 1>}, {transform_indices = @transform_3, window_bounds = array<i64: 1, 4, 256>}]} {
    %c0 = arith.constant 0 : index
    %c0_0 = arith.constant 0 : index
    %0 = vector.load %arg3[%c0, %c0_0] : memref<4x4xf32, #tpu.memory_space<vmem>>, vector<4x4xf32>
    %c0_1 = arith.constant 0 : index
    %c0_2 = arith.constant 0 : index
    %c0_3 = arith.constant 0 : index
    %1 = vector.load %arg2[%c0_1, %c0_2, %c0_3] : memref<1x4x256xf32, #tpu.memory_space<vmem>>, vector<1x4x256xf32>
    %2 = vector.shape_cast %1 : vector<1x4x256xf32> to vector<4x256xf32>
    %3 = math.absf %2 : vector<4x256xf32>
    %4 = vector.extract_strided_slice %0 {offsets = [0, 0], sizes = [4, 1], strides = [1, 1]} : vector<4x4xf32> to vector<4x1xf32>
    %5 = vector.extract_strided_slice %3 {offsets = [0, 0], sizes = [1, 256], strides = [1, 1]} : vector<4x256xf32> to vector<1x256xf32>
    %6 = vector.broadcast %4 : vector<4x1xf32> to vector<4x256xf32>
    %7 = vector.broadcast %5 : vector<1x256xf32> to vector<4x256xf32>
    %8 = arith.mulf %6, %7 : vector<4x256xf32>
    %9 = vector.extract_strided_slice %0 {offsets = [0, 1], sizes = [4, 1], strides = [1, 1]} : vector<4x4xf32> to vector<4x1xf32>
    %10 = vector.extract_strided_slice %3 {offsets = [1, 0], sizes = [1, 256], strides = [1, 1]} : vector<4x256xf32> to vector<1x256xf32>
    %11 = vector.broadcast %9 : vector<4x1xf32> to vector<4x256xf32>
    %12 = vector.broadcast %10 : vector<1x256xf32> to vector<4x256xf32>
    %13 = arith.mulf %11, %12 : vector<4x256xf32>
    %14 = arith.addf %8, %13 : vector<4x256xf32>
    %15 = vector.extract_strided_slice %0 {offsets = [0, 2], sizes = [4, 1], strides = [1, 1]} : vector<4x4xf32> to vector<4x1xf32>
    %16 = vector.extract_strided_slice %3 {offsets = [2, 0], sizes = [1, 256], strides = [1, 1]} : vector<4x256xf32> to vector<1x256xf32>
    %17 = vector.broadcast %15 : vector<4x1xf32> to vector<4x256xf32>
    %18 = vector.broadcast %16 : vector<1x256xf32> to vector<4x256xf32>
    %19 = arith.mulf %17, %18 : vector<4x256xf32>
    %20 = arith.addf %14, %19 : vector<4x256xf32>
    %21 = vector.extract_strided_slice %0 {offsets = [0, 3], sizes = [4, 1], strides = [1, 1]} : vector<4x4xf32> to vector<4x1xf32>
    %22 = vector.extract_strided_slice %3 {offsets = [3, 0], sizes = [1, 256], strides = [1, 1]} : vector<4x256xf32> to vector<1x256xf32>
    %23 = vector.broadcast %21 : vector<4x1xf32> to vector<4x256xf32>
    %24 = vector.broadcast %22 : vector<1x256xf32> to vector<4x256xf32>
    %25 = arith.mulf %23, %24 : vector<4x256xf32>
    %26 = arith.addf %20, %25 : vector<4x256xf32>
    %c0_4 = arith.constant 0 : index
    %c0_5 = arith.constant 0 : index
    %27 = vector.load %arg4[%c0_4, %c0_5] : memref<4x1xf32, #tpu.memory_space<vmem>>, vector<4x1xf32>
    %28 = vector.broadcast %27 : vector<4x1xf32> to vector<4x256xf32>
    %29 = arith.addf %26, %28 : vector<4x256xf32>
    %c0_6 = arith.constant 0 : index
    %c0_7 = arith.constant 0 : index
    %c0_8 = arith.constant 0 : index
    %30 = vector.load %arg5[%c0_6, %c0_7, %c0_8] : memref<1x4x256xf32, #tpu.memory_space<vmem>>, vector<1x4x256xf32>
    %31 = vector.shape_cast %30 : vector<1x4x256xf32> to vector<4x256xf32>
    %32 = vector.shape_cast %29 : vector<4x256xf32> to vector<1x4x256xf32>
    tpu.vector_store %arg5[%c0_6, %c0_7, %c0_8], %32 {strides = array<i32>} : memref<1x4x256xf32, #tpu.memory_space<vmem>>, vector<1x4x256xf32>,
    return
  }
  func.func @transform_0(%arg0: i32, %arg1: i32) -> (i32, i32, i32) {
    %c0_i32 = arith.constant 0 : i32
    %c0_i32_0 = arith.constant 0 : i32
    return %arg0, %c0_i32, %arg1 : i32, i32, i32
  }
  func.func @transform_1(%arg0: i32, %arg1: i32) -> (i32, i32) {
    %c0_i32 = arith.constant 0 : i32
    %c0_i32_0 = arith.constant 0 : i32
    %c0_i32_1 = arith.constant 0 : i32
    return %c0_i32, %c0_i32_0 : i32, i32
  }
  func.func @transform_2(%arg0: i32, %arg1: i32) -> (i32, i32) {
    %c0_i32 = arith.constant 0 : i32
    %c0_i32_0 = arith.constant 0 : i32
    %c0_i32_1 = arith.constant 0 : i32
    return %c0_i32, %c0_i32_0 : i32, i32
  }
  func.func @transform_3(%arg0: i32, %arg1: i32) -> (i32, i32, i32) {
    %c0_i32 = arith.constant 0 : i32
    %c0_i32_0 = arith.constant 0 : i32
    return %arg0, %c0_i32, %arg1 : i32, i32, i32
  }
}

</mosaic_0001>

<llo_original>
// kernel: freprocess.3
$region0: #{freprocess.3}
  #allocation0 [shape = 'u32[]', space=smem, size = 0x4, offset = 0x4, fixed_abs, tag = 'smem constant byte address 0x4 - core index']
  #allocation1 [shape = 'u32[72,128]{1,0:T(1,128)}', space=vmem, size = 0x9000, scoped, tag = 'internal scratch']
  %s0 = inlined_call_operand.vmem [shape: f32[2,4,256], index: 0, kind: input, shape index: {}]
  %s1 = inlined_call_operand.vmem [shape: f32[2,4,256], index: 1, kind: input, shape index: {}]
  %s2 = inlined_call_operand.vmem [shape: f32[8,4], index: 2, kind: input, shape index: {}]
  %s3 = inlined_call_operand.vmem [shape: f32[8,4], index: 3, kind: input, shape index: {}]
  %s4 = inlined_call_operand.vmem [shape: f32[8,1], index: 4, kind: input, shape index: {}]
  %s5 = inlined_call_operand.vmem [shape: f32[2,8,256], index: 5, kind: output, shape index: {}]
  %s6 = sld [smem:[#allocation0]]
  $region53: #{freprocess.3} parent=0
    _
  %s8 = ssub.s32 1, %s6
  %s9 = scalar_select 0, %s8, %s6
  loop: start=0, step=1, limit=4
  $region2: #{freprocess.3} parent=0 // loop_pre_header
    _
  $region3: #{freprocess.3} parent=0 // loop_header
    %s11 = sphi 0, %s15
    %p12 = scmp.ge.s32.totalorder %s11, 4
    %s18 = sphi 0, %s30
    %s19 = sphi 0, %s26
    %s20 = sphi 0, %s18
    %s21 = sphi 0, %s19
    %s22 = sphi 0, %s20
    %s23 = sphi 0, %s21
    %s35 = sphi 0, %s37
    %s38 = sphi 0, %s35
    %s39 = sphi 0, %s38
    %s55 = sphi 0, %s39
    %s63 = sphi 0, %s65
    %s66 = sphi 0, %s63
    %s67 = sphi 0, %s66
    %s83 = sphi 0, %s67
    %s87 = sphi 0, %s87
    %s89 = sphi 0, %s87
    %s90 = sphi 0, %s89
    %s104 = sphi 0, %s90
    %s108 = sphi 0, %s108
    %s110 = sphi 0, %s108
    %s111 = sphi 0, %s110
    %s125 = sphi 0, %s111
    %s129 = sphi 0, %s129
    %s131 = sphi 0, %s129
    %s132 = sphi 0, %s131
    %s146 = sphi 0, %s132
    %s154 = sphi 0, %s156
    %s157 = sphi 0, %s154
    %s158 = sphi 0, %s157
    %s174 = sphi 0, %s158
  $region4: #{freprocess.3} parent=0 // loop_header_branch
    %14 = sbr.rel (%p12) target = $region8
  $region5: #{freprocess.3} parent=0 // loop_body
    %s16 = ssub.s32 %s11, 1
    %s17 = ssub.s32 %s11, 2
    %s24 = sadd.s32 1, %s19
    %p25 = scmp.ge.s32.totalorder %s24, 1
    %s26 = scalar_select %p25, 0, %s24
    %s27 = sadd.s32 1, %s18
    %s28 = scalar_select %p25, %s27, %s18
    %p29 = scmp.ge.s32.totalorder %s28, 2
    %s30 = scalar_select %p29, 0, %s28
    %s31 = ssub.s32 %s18, %s30
    %s32 = ssub.s32 %s19, %s26
    %s33 = sor.u32 %s31, %s32
    %p34 = scmp.eq.s32.totalorder %s33, 0
    %s36 = sadd.s32 %s35, 1
    %s37 = scalar_select %p34, %s35, %s36
    %p40 = pneg %p34
    %p41 = scmp.eq.s32.totalorder %s11, 1
    %p42 = por %p40, %p41
    %p43 = scmp.ne.s32.totalorder %s35, %s38
    %p44 = scmp.eq.s32.totalorder %s11, 0
    %p45 = por %p43, %p44
    %p46 = scmp.ne.s32.totalorder %s35, %s38
    %p47 = scmp.eq.s32.totalorder %s16, 1
    %p48 = por %p46, %p47
    %p49 = scmp.ne.s32.totalorder %s38, %s39
    %p50 = scmp.eq.s32.totalorder %s16, 0
    %p51 = por %p49, %p50
    %p52 = scmp.ne.s32.totalorder %s38, %s39
    %p53 = scmp.eq.s32.totalorder %s17, 1
    %p54 = por %p52, %p53
    %p56 = scmp.ne.s32.totalorder %s39, %s55
    %p57 = scmp.eq.s32.totalorder %s17, 0
    %p58 = por %p56, %p57
    %s59 = ssub.s32 %s18, %s30
    %s60 = ssub.s32 %s19, %s26
    %s61 = sor.u32 %s59, %s60
    %p62 = scmp.eq.s32.totalorder %s61, 0
    %s64 = sadd.s32 %s63, 1
    %s65 = scalar_select %p62, %s63, %s64
    %p68 = pneg %p62
    %p69 = scmp.eq.s32.totalorder %s11, 1
    %p70 = por %p68, %p69
    %p71 = scmp.ne.s32.totalorder %s63, %s66
    %p72 = scmp.eq.s32.totalorder %s11, 0
    %p73 = por %p71, %p72
    %p74 = scmp.ne.s32.totalorder %s63, %s66
    %p75 = scmp.eq.s32.totalorder %s16, 1
    %p76 = por %p74, %p75
    %p77 = scmp.ne.s32.totalorder %s66, %s67
    %p78 = scmp.eq.s32.totalorder %s16, 0
    %p79 = por %p77, %p78
    %p80 = scmp.ne.s32.totalorder %s66, %s67
    %p81 = scmp.eq.s32.totalorder %s17, 1
    %p82 = por %p80, %p81
    %p84 = scmp.ne.s32.totalorder %s67, %s83
    %p85 = scmp.eq.s32.totalorder %s17, 0
    %p86 = por %p84, %p85
    %s88 = sadd.s32 %s87, 1
    %p91 = scmp.eq.s32.totalorder %s11, 1
    %p92 = scmp.ne.s32.totalorder %s87, %s89
    %p93 = scmp.eq.s32.totalorder %s11, 0
    %p94 = por %p92, %p93
    %p95 = scmp.ne.s32.totalorder %s87, %s89
    %p96 = scmp.eq.s32.totalorder %s16, 1
    %p97 = por %p95, %p96
    %p98 = scmp.ne.s32.totalorder %s89, %s90
    %p99 = scmp.eq.s32.totalorder %s16, 0
    %p100 = por %p98, %p99
    %p101 = scmp.ne.s32.totalorder %s89, %s90
    %p102 = scmp.eq.s32.totalorder %s17, 1
    %p103 = por %p101, %p102
    %p105 = scmp.ne.s32.totalorder %s90, %s104
    %p106 = scmp.eq.s32.totalorder %s17, 0
    %p107 = por %p105, %p106
    %s109 = sadd.s32 %s108, 1
    %p112 = scmp.eq.s32.totalorder %s11, 1
    %p113 = scmp.ne.s32.totalorder %s108, %s110
    %p114 = scmp.eq.s32.totalorder %s11, 0
    %p115 = por %p113, %p114
    %p116 = scmp.ne.s32.totalorder %s108, %s110
    %p117 = scmp.eq.s32.totalorder %s16, 1
    %p118 = por %p116, %p117
    %p119 = scmp.ne.s32.totalorder %s110, %s111
    %p120 = scmp.eq.s32.totalorder %s16, 0
    %p121 = por %p119, %p120
    %p122 = scmp.ne.s32.totalorder %s110, %s111
    %p123 = scmp.eq.s32.totalorder %s17, 1
    %p124 = por %p122, %p123
    %p126 = scmp.ne.s32.totalorder %s111, %s125
    %p127 = scmp.eq.s32.totalorder %s17, 0
    %p128 = por %p126, %p127
    %s130 = sadd.s32 %s129, 1
    %p133 = scmp.eq.s32.totalorder %s11, 1
    %p134 = scmp.ne.s32.totalorder %s129, %s131
    %p135 = scmp.eq.s32.totalorder %s11, 0
    %p136 = por %p134, %p135
    %p137 = scmp.ne.s32.totalorder %s129, %s131
    %p138 = scmp.eq.s32.totalorder %s16, 1
    %p139 = por %p137, %p138
    %p140 = scmp.ne.s32.totalorder %s131, %s132
    %p141 = scmp.eq.s32.totalorder %s16, 0
    %p142 = por %p140, %p141
    %p143 = scmp.ne.s32.totalorder %s131, %s132
    %p144 = scmp.eq.s32.totalorder %s17, 1
    %p145 = por %p143, %p144
    %p147 = scmp.ne.s32.totalorder %s132, %s146
    %p148 = scmp.eq.s32.totalorder %s17, 0
    %p149 = por %p147, %p148
    %s150 = ssub.s32 %s18, %s30
    %s151 = ssub.s32 %s19, %s26
    %s152 = sor.u32 %s150, %s151
    %p153 = scmp.eq.s32.totalorder %s152, 0
    %s155 = sadd.s32 %s154, 1
    %s156 = scalar_select %p153, %s154, %s155
    %p159 = pneg %p153
    %p160 = scmp.eq.s32.totalorder %s11, 1
    %p161 = por %p159, %p160
    %p162 = scmp.ne.s32.totalorder %s154, %s157
    %p163 = scmp.eq.s32.totalorder %s11, 0
    %p164 = por %p162, %p163
    %p165 = scmp.ne.s32.totalorder %s154, %s157
    %p166 = scmp.eq.s32.totalorder %s16, 1
    %p167 = por %p165, %p166
    %p168 = scmp.ne.s32.totalorder %s157, %s158
    %p169 = scmp.eq.s32.totalorder %s16, 0
    %p170 = por %p168, %p169
    %p171 = scmp.ne.s32.totalorder %s157, %s158
    %p172 = scmp.eq.s32.totalorder %s17, 1
    %p173 = por %p171, %p172
    %p175 = scmp.ne.s32.totalorder %s158, %s174
    %p176 = scmp.eq.s32.totalorder %s17, 0
    %p177 = por %p175, %p176
    %p178 = scmp.le.s32.totalorder 1, %s11
    %p179 = scmp.lt.s32.totalorder %s11, 3
    %p180 = pnand %p178, %p179
    %p181 = pneg %p180
    // Predicated region
    $region9: #{freprocess.3} parent=5 // pred_check
      _
    $region10: #{freprocess.3} parent=5 // pred_check_branch
      %183 = sbr.rel (%p180) target = $region12
    $region11: #{freprocess.3} parent=5 // pred_region
      %s184 = ssub.s32 %s11, 1
      // Predicated region
      $region13: #{freprocess.3} parent=11 // pred_check
        %p185 = pneg %p100
      $region14: #{freprocess.3} parent=11 // pred_check_branch
        %187 = sbr.rel (%p185) target = $region16
      $region15: #{freprocess.3} parent=11 // pred_region
        _
      $region16: #{freprocess.3} parent=11 // pred_fallthru
        _
      // Predicated region
      $region17: #{freprocess.3} parent=11 // pred_check
        %p188 = pneg %p121
      $region18: #{freprocess.3} parent=11 // pred_check_branch
        %190 = sbr.rel (%p188) target = $region20
      $region19: #{freprocess.3} parent=11 // pred_region
        _
      $region20: #{freprocess.3} parent=11 // pred_fallthru
        _
      // Predicated region
      $region21: #{freprocess.3} parent=11 // pred_check
        %p191 = pneg %p142
      $region22: #{freprocess.3} parent=11 // pred_check_branch
        %193 = sbr.rel (%p191) target = $region24
      $region23: #{freprocess.3} parent=11 // pred_region
        _
      $region24: #{freprocess.3} parent=11 // pred_fallthru
        _
    $region12: #{freprocess.3} parent=5 // pred_fallthru
      _
    %p194 = scmp.lt.s32.totalorder %s11, 2
    // Predicated region
    $region25: #{freprocess.3} parent=5 // pred_check
      %p195 = pneg %p194
    $region26: #{freprocess.3} parent=5 // pred_check_branch
      %197 = sbr.rel (%p195) target = $region28
    $region27: #{freprocess.3} parent=5 // pred_region
      // Predicated region
      $region29: #{freprocess.3} parent=27 // pred_check
        %p198 = pneg %p45
      $region30: #{freprocess.3} parent=27 // pred_check_branch
        %200 = sbr.rel (%p198) target = $region32
      $region31: #{freprocess.3} parent=27 // pred_region
        %s201 = smul.u32 2, %s19
        %p202 = scmp.lt.s32.totalorder %s18, 1
        %s203 = scalar_select %p202, %s18, 1
        %p204 = scmp.lt.s32.totalorder %s201, 1
        %s205 = scalar_select %p204, %s201, 1
        %s206 = smul.addr %s203, 2
        %s207 = sadd.s32 %s205, %s206
        %s208 = smul.addr %s207, 4
        %s209 = scalar_lea.vmem %s0, %s208
        %s210 = smul.u32 2, %s19
      $region32: #{freprocess.3} parent=27 // pred_fallthru
        _
      // Predicated region
      $region33: #{freprocess.3} parent=27 // pred_check
        %p211 = pneg %p73
      $region34: #{freprocess.3} parent=27 // pred_check_branch
        %213 = sbr.rel (%p211) target = $region36
      $region35: #{freprocess.3} parent=27 // pred_region
        %s214 = smul.u32 2, %s19
        %p215 = scmp.lt.s32.totalorder %s18, 1
        %s216 = scalar_select %p215, %s18, 1
        %p217 = scmp.lt.s32.totalorder %s214, 1
        %s218 = scalar_select %p217, %s214, 1
        %s219 = smul.addr %s216, 2
        %s220 = sadd.s32 %s218, %s219
        %s221 = smul.addr %s220, 4
        %s222 = scalar_lea.vmem %s1, %s221
        %s223 = smul.u32 2, %s19
      $region36: #{freprocess.3} parent=27 // pred_fallthru
        _
    $region28: #{freprocess.3} parent=5 // pred_fallthru
      _
    %p224 = scmp.le.s32.totalorder 1, %s11
    %p225 = scmp.lt.s32.totalorder %s11, 3
    %p226 = pnand %p224, %p225
    %p227 = pneg %p226
    // Predicated region
    $region37: #{freprocess.3} parent=5 // pred_check
      _
    $region38: #{freprocess.3} parent=5 // pred_check_branch
      %229 = sbr.rel (%p226) target = $region40
    $region39: #{freprocess.3} parent=5 // pred_region
      %s230 = ssub.s32 %s11, 1
      %s231 = smul.u32 2, %s21
      %p232 = scmp.lt.s32.totalorder %s20, 1
      %s233 = scalar_select %p232, %s20, 1
      %p234 = scmp.lt.s32.totalorder %s231, 1
      %s235 = scalar_select %p234, %s231, 1
      %s236 = smul.addr %s233, 2
      %s237 = sadd.s32 %s235, %s236
      %s238 = smul.addr %s237, 4
      %s239 = scalar_lea.vmem %s0, %s238
      %p240 = pneg %p51
      %p241 = pneg %p48
      %s242 = smul.u32 2, %s21
      %p243 = scmp.lt.s32.totalorder %s20, 1
      %s244 = scalar_select %p243, %s20, 1
      %p245 = scmp.lt.s32.totalorder %s242, 1
      %s246 = scalar_select %p245, %s242, 1
      %s247 = smul.addr %s244, 2
      %s248 = sadd.s32 %s246, %s247
      %s249 = smul.addr %s248, 4
      %s250 = scalar_lea.vmem %s1, %s249
      %p251 = pneg %p79
      %p252 = pneg %p76
      %p253 = pneg %p100
      %p254 = pneg %p97
      %p255 = pneg %p121
      %p256 = pneg %p118
      %p257 = pneg %p142
      %p258 = pneg %p139
      %p259 = pneg %p170
      %p260 = pneg %p167
      %s261 = smul.u32 2, %s21
      %p262 = scmp.lt.s32.totalorder %s20, 1
      %s263 = scalar_select %p262, %s20, 1
      %p264 = scmp.lt.s32.totalorder %s261, 1
      %s265 = scalar_select %p264, %s261, 1
      %s266 = smul.addr %s263, 2
      %s267 = sadd.s32 %s265, %s266
      %s268 = smul.addr %s267, 8
      %s269 = scalar_lea.vmem %s5, %s268
      %s270 = smul.u32 2, %s21
      %p271 = scmp.lt.s32.totalorder %s20, 1
      %s272 = scalar_select %p271, %s20, 1
      %p273 = scmp.lt.s32.totalorder %s270, 1
      %s274 = scalar_select %p273, %s270, 1
      %s275 = smul.addr %s272, 2
      %s276 = sadd.s32 %s274, %s275
      %s277 = smul.addr %s276, 4
      %s278 = scalar_lea.vmem %s0, %s277
      %s279 = smul.u32 2, %s21
      %s280 = smul.u32 2, %s21
      %p281 = scmp.lt.s32.totalorder %s20, 1
      %s282 = scalar_select %p281, %s20, 1
      %p283 = scmp.lt.s32.totalorder %s280, 1
      %s284 = scalar_select %p283, %s280, 1
      %s285 = smul.addr %s282, 2
      %s286 = sadd.s32 %s284, %s285
      %s287 = smul.addr %s286, 4
      %s288 = scalar_lea.vmem %s1, %s287
      %s289 = smul.u32 2, %s21
      %s290 = smul.u32 2, %s21
      %p291 = scmp.lt.s32.totalorder %s20, 1
      %s292 = scalar_select %p291, %s20, 1
      %p293 = scmp.lt.s32.totalorder %s290, 1
      %s294 = scalar_select %p293, %s290, 1
      %s295 = smul.addr %s292, 2
      %s296 = sadd.s32 %s294, %s295
      %s297 = smul.addr %s296, 8
      %s298 = scalar_lea.vmem %s5, %s297
      %s299 = smul.u32 2, %s21
      %v300 = vld [vmem:[%s2] sm:$0xff]
      %v301 = vld [vmem:[%s278] sm:$0xff]
      %303 = vset.pattern.permute.xlu0 0
      %304 = vperm.xlu0 %303, %v300
      %v305 = vpop.permute.xlu0 %304
      %v308 = vperm.slane %v301, 0
      %v309 = vperm.slane %v301, 4
      %v312 = vperm.slane %v308, 0
      %v313 = vperm.slane %v309, 0
      %v314 = vmul.f32 %v305, %v312
      %v315 = vmul.f32 %v305, %v313
      %316 = vset.pattern.permute.xlu0 1
      %317 = vperm.xlu0 %316, %v300
      %v318 = vpop.permute.xlu0 %317
      %v320 = vperm.slane %v301, 1
      %v321 = vperm.slane %v301, 5
      %v324 = vperm.slane %v320, 1
      %v325 = vperm.slane %v321, 1
      %v326 = vmul.f32 %v318, %v324
      %v327 = vmul.f32 %v318, %v325
      %v328 = vadd.f32 %v314, %v326
      %v329 = vadd.f32 %v315, %v327
      %330 = vset.pattern.permute.xlu0 2
      %331 = vperm.xlu0 %330, %v300
      %v332 = vpop.permute.xlu0 %331
      %v334 = vperm.slane %v301, 2
      %v335 = vperm.slane %v301, 6
      %v338 = vperm.slane %v334, 2
      %v339 = vperm.slane %v335, 2
      %v340 = vmul.f32 %v332, %v338
      %v341 = vmul.f32 %v332, %v339
      %v342 = vadd.f32 %v328, %v340
      %v343 = vadd.f32 %v329, %v341
      %344 = vset.pattern.permute.xlu0 3
      %345 = vperm.xlu0 %344, %v300
      %v346 = vpop.permute.xlu0 %345
      %v348 = vperm.slane %v301, 3
      %v349 = vperm.slane %v301, 7
      %v352 = vperm.slane %v348, 3
      %v353 = vperm.slane %v349, 3
      %v354 = vmul.f32 %v346, %v352
      %v355 = vmul.f32 %v346, %v353
      %v356 = vadd.f32 %v342, %v354
      %v357 = vadd.f32 %v343, %v355
      %v358 = vld [vmem:[%s3] sm:$0xff]
      %v359 = vld [vmem:[%s288] sm:$0xff]
      %361 = vset.pattern.permute.xlu0 0
      %362 = vperm.xlu0 %361, %v358
      %v363 = vpop.permute.xlu0 %362
      %v366 = vperm.slane %v359, 0
      %v367 = vperm.slane %v359, 4
      %v370 = vperm.slane %v366, 0
      %v371 = vperm.slane %v367, 0
      %v372 = vmul.f32 %v363, %v370
      %v373 = vmul.f32 %v363, %v371
      %374 = vset.pattern.permute.xlu0 1
      %375 = vperm.xlu0 %374, %v358
      %v376 = vpop.permute.xlu0 %375
      %v378 = vperm.slane %v359, 1
      %v379 = vperm.slane %v359, 5
      %v382 = vperm.slane %v378, 1
      %v383 = vperm.slane %v379, 1
      %v384 = vmul.f32 %v376, %v382
      %v385 = vmul.f32 %v376, %v383
      %v386 = vadd.f32 %v372, %v384
      %v387 = vadd.f32 %v373, %v385
      %388 = vset.pattern.permute.xlu0 2
      %389 = vperm.xlu0 %388, %v358
      %v390 = vpop.permute.xlu0 %389
      %v392 = vperm.slane %v359, 2
      %v393 = vperm.slane %v359, 6
      %v396 = vperm.slane %v392, 2
      %v397 = vperm.slane %v393, 2
      %v398 = vmul.f32 %v390, %v396
      %v399 = vmul.f32 %v390, %v397
      %v400 = vadd.f32 %v386, %v398
      %v401 = vadd.f32 %v387, %v399
      %402 = vset.pattern.permute.xlu0 3
      %403 = vperm.xlu0 %402, %v358
      %v404 = vpop.permute.xlu0 %403
      %v406 = vperm.slane %v359, 3
      %v407 = vperm.slane %v359, 7
      %v410 = vperm.slane %v406, 3
      %v411 = vperm.slane %v407, 3
      %v412 = vmul.f32 %v404, %v410
      %v413 = vmul.f32 %v404, %v411
      %v414 = vadd.f32 %v400, %v412
      %v415 = vadd.f32 %v401, %v413
      %v416 = vadd.f32 %v356, %v414
      %v417 = vadd.f32 %v357, %v415
      %v418 = vld [vmem:[%s4] sm:$0xff]
      %420 = vset.pattern.permute.xlu0 0
      %421 = vperm.xlu0 %420, %v418
      %v422 = vpop.permute.xlu0 %421
      %v424 = vadd.f32 %v416, %v422
      %v425 = vadd.f32 %v417, %v422
      %v426 = vadd.f32 %v424, 1e-08
      %v427 = vadd.f32 %v425, 1e-08
      %428 = vst [vmem:[%s298] sm:$0xff] %v426
      %429 = vst [vmem:[%s298 + $0x8] sm:$0xff] %v427
      %s430 = smul.u32 2, %s21
      %p431 = scmp.lt.s32.totalorder %s20, 1
      %s432 = scalar_select %p431, %s20, 1
      %p433 = scmp.lt.s32.totalorder %s430, 1
      %s434 = scalar_select %p433, %s430, 1
      %s435 = smul.addr %s432, 2
      %s436 = sadd.s32 %s434, %s435
      %s437 = smul.addr %s436, 8
      %s438 = scalar_lea.vmem %s5, %s437
      // Predicated region
      $region41: #{freprocess.3} parent=39 // pred_check
        %p439 = pneg %p167
      $region42: #{freprocess.3} parent=39 // pred_check_branch
        %441 = sbr.rel (%p439) target = $region44
      $region43: #{freprocess.3} parent=39 // pred_region
        %s442 = smul.u32 2, %s21
      $region44: #{freprocess.3} parent=39 // pred_fallthru
        _
    $region40: #{freprocess.3} parent=5 // pred_fallthru
      _
    %p443 = scmp.le.s32.totalorder 2, %s11
    // Predicated region
    $region45: #{freprocess.3} parent=5 // pred_check
      %p444 = pneg %p443
    $region46: #{freprocess.3} parent=5 // pred_check_branch
      %446 = sbr.rel (%p444) target = $region48
    $region47: #{freprocess.3} parent=5 // pred_region
      %s447 = ssub.s32 %s11, 2
      // Predicated region
      $region49: #{freprocess.3} parent=47 // pred_check
        %p448 = pneg %p173
      $region50: #{freprocess.3} parent=47 // pred_check_branch
        %450 = sbr.rel (%p448) target = $region52
      $region51: #{freprocess.3} parent=47 // pred_region
        %s451 = smul.u32 2, %s23
        %p452 = scmp.lt.s32.totalorder %s22, 1
        %s453 = scalar_select %p452, %s22, 1
        %p454 = scmp.lt.s32.totalorder %s451, 1
        %s455 = scalar_select %p454, %s451, 1
        %s456 = smul.addr %s453, 2
        %s457 = sadd.s32 %s455, %s456
        %s458 = smul.addr %s457, 8
        %s459 = scalar_lea.vmem %s5, %s458
      $region52: #{freprocess.3} parent=47 // pred_fallthru
        _
    $region48: #{freprocess.3} parent=5 // pred_fallthru
      _
  $region6: #{freprocess.3} parent=0 // loop_footer
    %s15 = sadd.s32 1, %s11
  $region7: #{freprocess.3} parent=0 // loop_footer_branch
    %10 = sbr.rel target = $region3
  $region8: #{freprocess.3} parent=0 // loop_exit
    _

// kernel: freprocess.4
$region0: #{freprocess.4}
  #allocation0 [shape = 'u32[]', space=smem, size = 0x4, offset = 0x4, fixed_abs, tag = 'smem constant byte address 0x4 - core index']
  #allocation1 [shape = 'u32[72,128]{1,0:T(1,128)}', space=vmem, size = 0x9000, scoped, tag = 'internal scratch']
  %s0 = inlined_call_operand.vmem [shape: f32[2,8,256], index: 0, kind: input, shape index: {}]
  %s1 = inlined_call_operand.vmem [shape: f32[2,8,256], index: 1, kind: input, shape index: {}]
  %s2 = inlined_call_operand.vmem [shape: f32[8,8], index: 2, kind: input, shape index: {}]
  %s3 = inlined_call_operand.vmem [shape: f32[8,8], index: 3, kind: input, shape index: {}]
  %s4 = inlined_call_operand.vmem [shape: f32[8,1], index: 4, kind: input, shape index: {}]
  %s5 = inlined_call_operand.vmem [shape: f32[8,8], index: 5, kind: input, shape index: {}]
  %s6 = inlined_call_operand.vmem [shape: f32[8,1], index: 6, kind: input, shape index: {}]
  %s7 = inlined_call_operand.vmem [shape: f32[2,8,256], index: 7, kind: output, shape index: {}]
  %s8 = sld [smem:[#allocation0]]
  $region61: #{freprocess.4} parent=0
    _
  %s10 = ssub.s32 1, %s8
  %s11 = scalar_select 0, %s10, %s8
  loop: start=0, step=1, limit=4
  $region2: #{freprocess.4} parent=0 // loop_pre_header
    _
  $region3: #{freprocess.4} parent=0 // loop_header
    %s13 = sphi 0, %s17
    %p14 = scmp.ge.s32.totalorder %s13, 4
    %s20 = sphi 0, %s32
    %s21 = sphi 0, %s28
    %s22 = sphi 0, %s20
    %s23 = sphi 0, %s21
    %s24 = sphi 0, %s22
    %s25 = sphi 0, %s23
    %s37 = sphi 0, %s39
    %s40 = sphi 0, %s37
    %s41 = sphi 0, %s40
    %s57 = sphi 0, %s41
    %s65 = sphi 0, %s67
    %s68 = sphi 0, %s65
    %s69 = sphi 0, %s68
    %s85 = sphi 0, %s69
    %s89 = sphi 0, %s89
    %s91 = sphi 0, %s89
    %s92 = sphi 0, %s91
    %s106 = sphi 0, %s92
    %s110 = sphi 0, %s110
    %s112 = sphi 0, %s110
    %s113 = sphi 0, %s112
    %s127 = sphi 0, %s113
    %s131 = sphi 0, %s131
    %s133 = sphi 0, %s131
    %s134 = sphi 0, %s133
    %s148 = sphi 0, %s134
    %s152 = sphi 0, %s152
    %s154 = sphi 0, %s152
    %s155 = sphi 0, %s154
    %s169 = sphi 0, %s155
    %s173 = sphi 0, %s173
    %s175 = sphi 0, %s173
    %s176 = sphi 0, %s175
    %s190 = sphi 0, %s176
    %s198 = sphi 0, %s200
    %s201 = sphi 0, %s198
    %s202 = sphi 0, %s201
    %s218 = sphi 0, %s202
  $region4: #{freprocess.4} parent=0 // loop_header_branch
    %16 = sbr.rel (%p14) target = $region8
  $region5: #{freprocess.4} parent=0 // loop_body
    %s18 = ssub.s32 %s13, 1
    %s19 = ssub.s32 %s13, 2
    %s26 = sadd.s32 1, %s21
    %p27 = scmp.ge.s32.totalorder %s26, 1
    %s28 = scalar_select %p27, 0, %s26
    %s29 = sadd.s32 1, %s20
    %s30 = scalar_select %p27, %s29, %s20
    %p31 = scmp.ge.s32.totalorder %s30, 2
    %s32 = scalar_select %p31, 0, %s30
    %s33 = ssub.s32 %s20, %s32
    %s34 = ssub.s32 %s21, %s28
    %s35 = sor.u32 %s33, %s34
    %p36 = scmp.eq.s32.totalorder %s35, 0
    %s38 = sadd.s32 %s37, 1
    %s39 = scalar_select %p36, %s37, %s38
    %p42 = pneg %p36
    %p43 = scmp.eq.s32.totalorder %s13, 1
    %p44 = por %p42, %p43
    %p45 = scmp.ne.s32.totalorder %s37, %s40
    %p46 = scmp.eq.s32.totalorder %s13, 0
    %p47 = por %p45, %p46
    %p48 = scmp.ne.s32.totalorder %s37, %s40
    %p49 = scmp.eq.s32.totalorder %s18, 1
    %p50 = por %p48, %p49
    %p51 = scmp.ne.s32.totalorder %s40, %s41
    %p52 = scmp.eq.s32.totalorder %s18, 0
    %p53 = por %p51, %p52
    %p54 = scmp.ne.s32.totalorder %s40, %s41
    %p55 = scmp.eq.s32.totalorder %s19, 1
    %p56 = por %p54, %p55
    %p58 = scmp.ne.s32.totalorder %s41, %s57
    %p59 = scmp.eq.s32.totalorder %s19, 0
    %p60 = por %p58, %p59
    %s61 = ssub.s32 %s20, %s32
    %s62 = ssub.s32 %s21, %s28
    %s63 = sor.u32 %s61, %s62
    %p64 = scmp.eq.s32.totalorder %s63, 0
    %s66 = sadd.s32 %s65, 1
    %s67 = scalar_select %p64, %s65, %s66
    %p70 = pneg %p64
    %p71 = scmp.eq.s32.totalorder %s13, 1
    %p72 = por %p70, %p71
    %p73 = scmp.ne.s32.totalorder %s65, %s68
    %p74 = scmp.eq.s32.totalorder %s13, 0
    %p75 = por %p73, %p74
    %p76 = scmp.ne.s32.totalorder %s65, %s68
    %p77 = scmp.eq.s32.totalorder %s18, 1
    %p78 = por %p76, %p77
    %p79 = scmp.ne.s32.totalorder %s68, %s69
    %p80 = scmp.eq.s32.totalorder %s18, 0
    %p81 = por %p79, %p80
    %p82 = scmp.ne.s32.totalorder %s68, %s69
    %p83 = scmp.eq.s32.totalorder %s19, 1
    %p84 = por %p82, %p83
    %p86 = scmp.ne.s32.totalorder %s69, %s85
    %p87 = scmp.eq.s32.totalorder %s19, 0
    %p88 = por %p86, %p87
    %s90 = sadd.s32 %s89, 1
    %p93 = scmp.eq.s32.totalorder %s13, 1
    %p94 = scmp.ne.s32.totalorder %s89, %s91
    %p95 = scmp.eq.s32.totalorder %s13, 0
    %p96 = por %p94, %p95
    %p97 = scmp.ne.s32.totalorder %s89, %s91
    %p98 = scmp.eq.s32.totalorder %s18, 1
    %p99 = por %p97, %p98
    %p100 = scmp.ne.s32.totalorder %s91, %s92
    %p101 = scmp.eq.s32.totalorder %s18, 0
    %p102 = por %p100, %p101
    %p103 = scmp.ne.s32.totalorder %s91, %s92
    %p104 = scmp.eq.s32.totalorder %s19, 1
    %p105 = por %p103, %p104
    %p107 = scmp.ne.s32.totalorder %s92, %s106
    %p108 = scmp.eq.s32.totalorder %s19, 0
    %p109 = por %p107, %p108
    %s111 = sadd.s32 %s110, 1
    %p114 = scmp.eq.s32.totalorder %s13, 1
    %p115 = scmp.ne.s32.totalorder %s110, %s112
    %p116 = scmp.eq.s32.totalorder %s13, 0
    %p117 = por %p115, %p116
    %p118 = scmp.ne.s32.totalorder %s110, %s112
    %p119 = scmp.eq.s32.totalorder %s18, 1
    %p120 = por %p118, %p119
    %p121 = scmp.ne.s32.totalorder %s112, %s113
    %p122 = scmp.eq.s32.totalorder %s18, 0
    %p123 = por %p121, %p122
    %p124 = scmp.ne.s32.totalorder %s112, %s113
    %p125 = scmp.eq.s32.totalorder %s19, 1
    %p126 = por %p124, %p125
    %p128 = scmp.ne.s32.totalorder %s113, %s127
    %p129 = scmp.eq.s32.totalorder %s19, 0
    %p130 = por %p128, %p129
    %s132 = sadd.s32 %s131, 1
    %p135 = scmp.eq.s32.totalorder %s13, 1
    %p136 = scmp.ne.s32.totalorder %s131, %s133
    %p137 = scmp.eq.s32.totalorder %s13, 0
    %p138 = por %p136, %p137
    %p139 = scmp.ne.s32.totalorder %s131, %s133
    %p140 = scmp.eq.s32.totalorder %s18, 1
    %p141 = por %p139, %p140
    %p142 = scmp.ne.s32.totalorder %s133, %s134
    %p143 = scmp.eq.s32.totalorder %s18, 0
    %p144 = por %p142, %p143
    %p145 = scmp.ne.s32.totalorder %s133, %s134
    %p146 = scmp.eq.s32.totalorder %s19, 1
    %p147 = por %p145, %p146
    %p149 = scmp.ne.s32.totalorder %s134, %s148
    %p150 = scmp.eq.s32.totalorder %s19, 0
    %p151 = por %p149, %p150
    %s153 = sadd.s32 %s152, 1
    %p156 = scmp.eq.s32.totalorder %s13, 1
    %p157 = scmp.ne.s32.totalorder %s152, %s154
    %p158 = scmp.eq.s32.totalorder %s13, 0
    %p159 = por %p157, %p158
    %p160 = scmp.ne.s32.totalorder %s152, %s154
    %p161 = scmp.eq.s32.totalorder %s18, 1
    %p162 = por %p160, %p161
    %p163 = scmp.ne.s32.totalorder %s154, %s155
    %p164 = scmp.eq.s32.totalorder %s18, 0
    %p165 = por %p163, %p164
    %p166 = scmp.ne.s32.totalorder %s154, %s155
    %p167 = scmp.eq.s32.totalorder %s19, 1
    %p168 = por %p166, %p167
    %p170 = scmp.ne.s32.totalorder %s155, %s169
    %p171 = scmp.eq.s32.totalorder %s19, 0
    %p172 = por %p170, %p171
    %s174 = sadd.s32 %s173, 1
    %p177 = scmp.eq.s32.totalorder %s13, 1
    %p178 = scmp.ne.s32.totalorder %s173, %s175
    %p179 = scmp.eq.s32.totalorder %s13, 0
    %p180 = por %p178, %p179
    %p181 = scmp.ne.s32.totalorder %s173, %s175
    %p182 = scmp.eq.s32.totalorder %s18, 1
    %p183 = por %p181, %p182
    %p184 = scmp.ne.s32.totalorder %s175, %s176
    %p185 = scmp.eq.s32.totalorder %s18, 0
    %p186 = por %p184, %p185
    %p187 = scmp.ne.s32.totalorder %s175, %s176
    %p188 = scmp.eq.s32.totalorder %s19, 1
    %p189 = por %p187, %p188
    %p191 = scmp.ne.s32.totalorder %s176, %s190
    %p192 = scmp.eq.s32.totalorder %s19, 0
    %p193 = por %p191, %p192
    %s194 = ssub.s32 %s20, %s32
    %s195 = ssub.s32 %s21, %s28
    %s196 = sor.u32 %s194, %s195
    %p197 = scmp.eq.s32.totalorder %s196, 0
    %s199 = sadd.s32 %s198, 1
    %s200 = scalar_select %p197, %s198, %s199
    %p203 = pneg %p197
    %p204 = scmp.eq.s32.totalorder %s13, 1
    %p205 = por %p203, %p204
    %p206 = scmp.ne.s32.totalorder %s198, %s201
    %p207 = scmp.eq.s32.totalorder %s13, 0
    %p208 = por %p206, %p207
    %p209 = scmp.ne.s32.totalorder %s198, %s201
    %p210 = scmp.eq.s32.totalorder %s18, 1
    %p211 = por %p209, %p210
    %p212 = scmp.ne.s32.totalorder %s201, %s202
    %p213 = scmp.eq.s32.totalorder %s18, 0
    %p214 = por %p212, %p213
    %p215 = scmp.ne.s32.totalorder %s201, %s202
    %p216 = scmp.eq.s32.totalorder %s19, 1
    %p217 = por %p215, %p216
    %p219 = scmp.ne.s32.totalorder %s202, %s218
    %p220 = scmp.eq.s32.totalorder %s19, 0
    %p221 = por %p219, %p220
    %p222 = scmp.le.s32.totalorder 1, %s13
    %p223 = scmp.lt.s32.totalorder %s13, 3
    %p224 = pnand %p222, %p223
    %p225 = pneg %p224
    // Predicated region
    $region9: #{freprocess.4} parent=5 // pred_check
      _
    $region10: #{freprocess.4} parent=5 // pred_check_branch
      %227 = sbr.rel (%p224) target = $region12
    $region11: #{freprocess.4} parent=5 // pred_region
      %s228 = ssub.s32 %s13, 1
      // Predicated region
      $region13: #{freprocess.4} parent=11 // pred_check
        %p229 = pneg %p102
      $region14: #{freprocess.4} parent=11 // pred_check_branch
        %231 = sbr.rel (%p229) target = $region16
      $region15: #{freprocess.4} parent=11 // pred_region
        _
      $region16: #{freprocess.4} parent=11 // pred_fallthru
        _
      // Predicated region
      $region17: #{freprocess.4} parent=11 // pred_check
        %p232 = pneg %p123
      $region18: #{freprocess.4} parent=11 // pred_check_branch
        %234 = sbr.rel (%p232) target = $region20
      $region19: #{freprocess.4} parent=11 // pred_region
        _
      $region20: #{freprocess.4} parent=11 // pred_fallthru
        _
      // Predicated region
      $region21: #{freprocess.4} parent=11 // pred_check
        %p235 = pneg %p144
      $region22: #{freprocess.4} parent=11 // pred_check_branch
        %237 = sbr.rel (%p235) target = $region24
      $region23: #{freprocess.4} parent=11 // pred_region
        _
      $region24: #{freprocess.4} parent=11 // pred_fallthru
        _
      // Predicated region
      $region25: #{freprocess.4} parent=11 // pred_check
        %p238 = pneg %p165
      $region26: #{freprocess.4} parent=11 // pred_check_branch
        %240 = sbr.rel (%p238) target = $region28
      $region27: #{freprocess.4} parent=11 // pred_region
        _
      $region28: #{freprocess.4} parent=11 // pred_fallthru
        _
      // Predicated region
      $region29: #{freprocess.4} parent=11 // pred_check
        %p241 = pneg %p186
      $region30: #{freprocess.4} parent=11 // pred_check_branch
        %243 = sbr.rel (%p241) target = $region32
      $region31: #{freprocess.4} parent=11 // pred_region
        _
      $region32: #{freprocess.4} parent=11 // pred_fallthru
        _
    $region12: #{freprocess.4} parent=5 // pred_fallthru
      _
    %p244 = scmp.lt.s32.totalorder %s13, 2
    // Predicated region
    $region33: #{freprocess.4} parent=5 // pred_check
      %p245 = pneg %p244
    $region34: #{freprocess.4} parent=5 // pred_check_branch
      %247 = sbr.rel (%p245) target = $region36
    $region35: #{freprocess.4} parent=5 // pred_region
      // Predicated region
      $region37: #{freprocess.4} parent=35 // pred_check
        %p248 = pneg %p47
      $region38: #{freprocess.4} parent=35 // pred_check_branch
        %250 = sbr.rel (%p248) target = $region40
      $region39: #{freprocess.4} parent=35 // pred_region
        %s251 = smul.u32 2, %s21
        %p252 = scmp.lt.s32.totalorder %s20, 1
        %s253 = scalar_select %p252, %s20, 1
        %p254 = scmp.lt.s32.totalorder %s251, 1
        %s255 = scalar_select %p254, %s251, 1
        %s256 = smul.addr %s253, 2
        %s257 = sadd.s32 %s255, %s256
        %s258 = smul.addr %s257, 8
        %s259 = scalar_lea.vmem %s0, %s258
        %s260 = smul.u32 2, %s21
      $region40: #{freprocess.4} parent=35 // pred_fallthru
        _
      // Predicated region
      $region41: #{freprocess.4} parent=35 // pred_check
        %p261 = pneg %p75
      $region42: #{freprocess.4} parent=35 // pred_check_branch
        %263 = sbr.rel (%p261) target = $region44
      $region43: #{freprocess.4} parent=35 // pred_region
        %s264 = smul.u32 2, %s21
        %p265 = scmp.lt.s32.totalorder %s20, 1
        %s266 = scalar_select %p265, %s20, 1
        %p267 = scmp.lt.s32.totalorder %s264, 1
        %s268 = scalar_select %p267, %s264, 1
        %s269 = smul.addr %s266, 2
        %s270 = sadd.s32 %s268, %s269
        %s271 = smul.addr %s270, 8
        %s272 = scalar_lea.vmem %s1, %s271
        %s273 = smul.u32 2, %s21
      $region44: #{freprocess.4} parent=35 // pred_fallthru
        _
    $region36: #{freprocess.4} parent=5 // pred_fallthru
      _
    %p274 = scmp.le.s32.totalorder 1, %s13
    %p275 = scmp.lt.s32.totalorder %s13, 3
    %p276 = pnand %p274, %p275
    %p277 = pneg %p276
    // Predicated region
    $region45: #{freprocess.4} parent=5 // pred_check
      _
    $region46: #{freprocess.4} parent=5 // pred_check_branch
      %279 = sbr.rel (%p276) target = $region48
    $region47: #{freprocess.4} parent=5 // pred_region
      %s280 = ssub.s32 %s13, 1
      %s281 = smul.u32 2, %s23
      %p282 = scmp.lt.s32.totalorder %s22, 1
      %s283 = scalar_select %p282, %s22, 1
      %p284 = scmp.lt.s32.totalorder %s281, 1
      %s285 = scalar_select %p284, %s281, 1
      %s286 = smul.addr %s283, 2
      %s287 = sadd.s32 %s285, %s286
      %s288 = smul.addr %s287, 8
      %s289 = scalar_lea.vmem %s0, %s288
      %p290 = pneg %p53
      %p291 = pneg %p50
      %s292 = smul.u32 2, %s23
      %p293 = scmp.lt.s32.totalorder %s22, 1
      %s294 = scalar_select %p293, %s22, 1
      %p295 = scmp.lt.s32.totalorder %s292, 1
      %s296 = scalar_select %p295, %s292, 1
      %s297 = smul.addr %s294, 2
      %s298 = sadd.s32 %s296, %s297
      %s299 = smul.addr %s298, 8
      %s300 = scalar_lea.vmem %s1, %s299
      %p301 = pneg %p81
      %p302 = pneg %p78
      %p303 = pneg %p102
      %p304 = pneg %p99
      %p305 = pneg %p123
      %p306 = pneg %p120
      %p307 = pneg %p144
      %p308 = pneg %p141
      %p309 = pneg %p165
      %p310 = pneg %p162
      %p311 = pneg %p186
      %p312 = pneg %p183
      %p313 = pneg %p214
      %p314 = pneg %p211
      %s315 = smul.u32 2, %s23
      %p316 = scmp.lt.s32.totalorder %s22, 1
      %s317 = scalar_select %p316, %s22, 1
      %p318 = scmp.lt.s32.totalorder %s315, 1
      %s319 = scalar_select %p318, %s315, 1
      %s320 = smul.addr %s317, 2
      %s321 = sadd.s32 %s319, %s320
      %s322 = smul.addr %s321, 8
      %s323 = scalar_lea.vmem %s7, %s322
      %s324 = smul.u32 2, %s23
      %p325 = scmp.lt.s32.totalorder %s22, 1
      %s326 = scalar_select %p325, %s22, 1
      %p327 = scmp.lt.s32.totalorder %s324, 1
      %s328 = scalar_select %p327, %s324, 1
      %s329 = smul.addr %s326, 2
      %s330 = sadd.s32 %s328, %s329
      %s331 = smul.addr %s330, 8
      %s332 = scalar_lea.vmem %s0, %s331
      %s333 = smul.u32 2, %s23
      %s334 = smul.u32 2, %s23
      %p335 = scmp.lt.s32.totalorder %s22, 1
      %s336 = scalar_select %p335, %s22, 1
      %p337 = scmp.lt.s32.totalorder %s334, 1
      %s338 = scalar_select %p337, %s334, 1
      %s339 = smul.addr %s336, 2
      %s340 = sadd.s32 %s338, %s339
      %s341 = smul.addr %s340, 8
      %s342 = scalar_lea.vmem %s1, %s341
      %s343 = smul.u32 2, %s23
      %s344 = smul.u32 2, %s23
      %p345 = scmp.lt.s32.totalorder %s22, 1
      %s346 = scalar_select %p345, %s22, 1
      %p347 = scmp.lt.s32.totalorder %s344, 1
      %s348 = scalar_select %p347, %s344, 1
      %s349 = smul.addr %s346, 2
      %s350 = sadd.s32 %s348, %s349
      %s351 = smul.addr %s350, 8
      %s352 = scalar_lea.vmem %s7, %s351
      %s353 = smul.u32 2, %s23
      %v354 = vld [vmem:[%s2] sm:$0xff]
      %v355 = vld [vmem:[%s332] sm:$0xff]
      %v356 = vld [vmem:[%s332 + $0x8] sm:$0xff]
      %358 = vset.pattern.permute.xlu0 0
      %359 = vperm.xlu0 %358, %v354
      %v360 = vpop.permute.xlu0 %359
      %v362 = vperm.slane %v355, 0
      %v363 = vperm.slane %v356, 0
      %v364 = vmul.f32 %v360, %v362
      %v365 = vmul.f32 %v360, %v363
      %366 = vset.pattern.permute.xlu0 1
      %367 = vperm.xlu0 %366, %v354
      %v368 = vpop.permute.xlu0 %367
      %v370 = vperm.slane %v355, 1
      %v371 = vperm.slane %v356, 1
      %v372 = vmul.f32 %v368, %v370
      %v373 = vmul.f32 %v368, %v371
      %v374 = vadd.f32 %v364, %v372
      %v375 = vadd.f32 %v365, %v373
      %376 = vset.pattern.permute.xlu0 2
      %377 = vperm.xlu0 %376, %v354
      %v378 = vpop.permute.xlu0 %377
      %v380 = vperm.slane %v355, 2
      %v381 = vperm.slane %v356, 2
      %v382 = vmul.f32 %v378, %v380
      %v383 = vmul.f32 %v378, %v381
      %v384 = vadd.f32 %v374, %v382
      %v385 = vadd.f32 %v375, %v383
      %386 = vset.pattern.permute.xlu0 3
      %387 = vperm.xlu0 %386, %v354
      %v388 = vpop.permute.xlu0 %387
      %v390 = vperm.slane %v355, 3
      %v391 = vperm.slane %v356, 3
      %v392 = vmul.f32 %v388, %v390
      %v393 = vmul.f32 %v388, %v391
      %v394 = vadd.f32 %v384, %v392
      %v395 = vadd.f32 %v385, %v393
      %396 = vset.pattern.permute.xlu0 4
      %397 = vperm.xlu0 %396, %v354
      %v398 = vpop.permute.xlu0 %397
      %v400 = vperm.slane %v355, 4
      %v401 = vperm.slane %v356, 4
      %v402 = vmul.f32 %v398, %v400
      %v403 = vmul.f32 %v398, %v401
      %v404 = vadd.f32 %v394, %v402
      %v405 = vadd.f32 %v395, %v403
      %406 = vset.pattern.permute.xlu0 5
      %407 = vperm.xlu0 %406, %v354
      %v408 = vpop.permute.xlu0 %407
      %v410 = vperm.slane %v355, 5
      %v411 = vperm.slane %v356, 5
      %v412 = vmul.f32 %v408, %v410
      %v413 = vmul.f32 %v408, %v411
      %v414 = vadd.f32 %v404, %v412
      %v415 = vadd.f32 %v405, %v413
      %416 = vset.pattern.permute.xlu0 6
      %417 = vperm.xlu0 %416, %v354
      %v418 = vpop.permute.xlu0 %417
      %v420 = vperm.slane %v355, 6
      %v421 = vperm.slane %v356, 6
      %v422 = vmul.f32 %v418, %v420
      %v423 = vmul.f32 %v418, %v421
      %v424 = vadd.f32 %v414, %v422
      %v425 = vadd.f32 %v415, %v423
      %426 = vset.pattern.permute.xlu0 7
      %427 = vperm.xlu0 %426, %v354
      %v428 = vpop.permute.xlu0 %427
      %v430 = vperm.slane %v355, 7
      %v431 = vperm.slane %v356, 7
      %v432 = vmul.f32 %v428, %v430
      %v433 = vmul.f32 %v428, %v431
      %v434 = vadd.f32 %v424, %v432
      %v435 = vadd.f32 %v425, %v433
      %v436 = vld [vmem:[%s3] sm:$0xff]
      %v437 = vld [vmem:[%s342] sm:$0xff]
      %v438 = vld [vmem:[%s342 + $0x8] sm:$0xff]
      %440 = vset.pattern.permute.xlu0 0
      %441 = vperm.xlu0 %440, %v436
      %v442 = vpop.permute.xlu0 %441
      %v444 = vperm.slane %v437, 0
      %v445 = vperm.slane %v438, 0
      %v446 = vmul.f32 %v442, %v444
      %v447 = vmul.f32 %v442, %v445
      %448 = vset.pattern.permute.xlu0 1
      %449 = vperm.xlu0 %448, %v436
      %v450 = vpop.permute.xlu0 %449
      %v452 = vperm.slane %v437, 1
      %v453 = vperm.slane %v438, 1
      %v454 = vmul.f32 %v450, %v452
      %v455 = vmul.f32 %v450, %v453
      %v456 = vadd.f32 %v446, %v454
      %v457 = vadd.f32 %v447, %v455
      %458 = vset.pattern.permute.xlu0 2
      %459 = vperm.xlu0 %458, %v436
      %v460 = vpop.permute.xlu0 %459
      %v462 = vperm.slane %v437, 2
      %v463 = vperm.slane %v438, 2
      %v464 = vmul.f32 %v460, %v462
      %v465 = vmul.f32 %v460, %v463
      %v466 = vadd.f32 %v456, %v464
      %v467 = vadd.f32 %v457, %v465
      %468 = vset.pattern.permute.xlu0 3
      %469 = vperm.xlu0 %468, %v436
      %v470 = vpop.permute.xlu0 %469
      %v472 = vperm.slane %v437, 3
      %v473 = vperm.slane %v438, 3
      %v474 = vmul.f32 %v470, %v472
      %v475 = vmul.f32 %v470, %v473
      %v476 = vadd.f32 %v466, %v474
      %v477 = vadd.f32 %v467, %v475
      %478 = vset.pattern.permute.xlu0 4
      %479 = vperm.xlu0 %478, %v436
      %v480 = vpop.permute.xlu0 %479
      %v482 = vperm.slane %v437, 4
      %v483 = vperm.slane %v438, 4
      %v484 = vmul.f32 %v480, %v482
      %v485 = vmul.f32 %v480, %v483
      %v486 = vadd.f32 %v476, %v484
      %v487 = vadd.f32 %v477, %v485
      %488 = vset.pattern.permute.xlu0 5
      %489 = vperm.xlu0 %488, %v436
      %v490 = vpop.permute.xlu0 %489
      %v492 = vperm.slane %v437, 5
      %v493 = vperm.slane %v438, 5
      %v494 = vmul.f32 %v490, %v492
      %v495 = vmul.f32 %v490, %v493
      %v496 = vadd.f32 %v486, %v494
      %v497 = vadd.f32 %v487, %v495
      %498 = vset.pattern.permute.xlu0 6
      %499 = vperm.xlu0 %498, %v436
      %v500 = vpop.permute.xlu0 %499
      %v502 = vperm.slane %v437, 6
      %v503 = vperm.slane %v438, 6
      %v504 = vmul.f32 %v500, %v502
      %v505 = vmul.f32 %v500, %v503
      %v506 = vadd.f32 %v496, %v504
      %v507 = vadd.f32 %v497, %v505
      %508 = vset.pattern.permute.xlu0 7
      %509 = vperm.xlu0 %508, %v436
      %v510 = vpop.permute.xlu0 %509
      %v512 = vperm.slane %v437, 7
      %v513 = vperm.slane %v438, 7
      %v514 = vmul.f32 %v510, %v512
      %v515 = vmul.f32 %v510, %v513
      %v516 = vadd.f32 %v506, %v514
      %v517 = vadd.f32 %v507, %v515
      %v518 = vadd.f32 %v434, %v516
      %v519 = vadd.f32 %v435, %v517
      %v520 = vld [vmem:[%s4] sm:$0xff]
      %522 = vset.pattern.permute.xlu0 0
      %523 = vperm.xlu0 %522, %v520
      %v524 = vpop.permute.xlu0 %523
      %v526 = vadd.f32 %v518, %v524
      %v527 = vadd.f32 %v519, %v524
      %vm528 = vcmp.ge.f32.partialorder %v526, 0.0
      %vm529 = vcmp.ge.f32.partialorder %v527, 0.0
      %v530 = vmul.f32 %v526, 0.1
      %v531 = vmul.f32 %v527, 0.1
      %v532 = vsel %vm528, %v526, %v530
      %v533 = vsel %vm529, %v527, %v531
      %v534 = vld [vmem:[%s5] sm:$0xff]
      %536 = vset.pattern.permute.xlu0 0
      %537 = vperm.xlu0 %536, %v534
      %v538 = vpop.permute.xlu0 %537
      %v540 = vperm.slane %v532, 0
      %v541 = vperm.slane %v533, 0
      %v542 = vmul.f32 %v538, %v540
      %v543 = vmul.f32 %v538, %v541
      %544 = vset.pattern.permute.xlu0 1
      %545 = vperm.xlu0 %544, %v534
      %v546 = vpop.permute.xlu0 %545
      %v548 = vperm.slane %v532, 1
      %v549 = vperm.slane %v533, 1
      %v550 = vmul.f32 %v546, %v548
      %v551 = vmul.f32 %v546, %v549
      %v552 = vadd.f32 %v542, %v550
      %v553 = vadd.f32 %v543, %v551
      %554 = vset.pattern.permute.xlu0 2
      %555 = vperm.xlu0 %554, %v534
      %v556 = vpop.permute.xlu0 %555
      %v558 = vperm.slane %v532, 2
      %v559 = vperm.slane %v533, 2
      %v560 = vmul.f32 %v556, %v558
      %v561 = vmul.f32 %v556, %v559
      %v562 = vadd.f32 %v552, %v560
      %v563 = vadd.f32 %v553, %v561
      %564 = vset.pattern.permute.xlu0 3
      %565 = vperm.xlu0 %564, %v534
      %v566 = vpop.permute.xlu0 %565
      %v568 = vperm.slane %v532, 3
      %v569 = vperm.slane %v533, 3
      %v570 = vmul.f32 %v566, %v568
      %v571 = vmul.f32 %v566, %v569
      %v572 = vadd.f32 %v562, %v570
      %v573 = vadd.f32 %v563, %v571
      %574 = vset.pattern.permute.xlu0 4
      %575 = vperm.xlu0 %574, %v534
      %v576 = vpop.permute.xlu0 %575
      %v578 = vperm.slane %v532, 4
      %v579 = vperm.slane %v533, 4
      %v580 = vmul.f32 %v576, %v578
      %v581 = vmul.f32 %v576, %v579
      %v582 = vadd.f32 %v572, %v580
      %v583 = vadd.f32 %v573, %v581
      %584 = vset.pattern.permute.xlu0 5
      %585 = vperm.xlu0 %584, %v534
      %v586 = vpop.permute.xlu0 %585
      %v588 = vperm.slane %v532, 5
      %v589 = vperm.slane %v533, 5
      %v590 = vmul.f32 %v586, %v588
      %v591 = vmul.f32 %v586, %v589
      %v592 = vadd.f32 %v582, %v590
      %v593 = vadd.f32 %v583, %v591
      %594 = vset.pattern.permute.xlu0 6
      %595 = vperm.xlu0 %594, %v534
      %v596 = vpop.permute.xlu0 %595
      %v598 = vperm.slane %v532, 6
      %v599 = vperm.slane %v533, 6
      %v600 = vmul.f32 %v596, %v598
      %v601 = vmul.f32 %v596, %v599
      %v602 = vadd.f32 %v592, %v600
      %v603 = vadd.f32 %v593, %v601
      %604 = vset.pattern.permute.xlu0 7
      %605 = vperm.xlu0 %604, %v534
      %v606 = vpop.permute.xlu0 %605
      %v608 = vperm.slane %v532, 7
      %v609 = vperm.slane %v533, 7
      %v610 = vmul.f32 %v606, %v608
      %v611 = vmul.f32 %v606, %v609
      %v612 = vadd.f32 %v602, %v610
      %v613 = vadd.f32 %v603, %v611
      %v614 = vld [vmem:[%s6] sm:$0xff]
      %616 = vset.pattern.permute.xlu0 0
      %617 = vperm.xlu0 %616, %v614
      %v618 = vpop.permute.xlu0 %617
      %v620 = vadd.f32 %v612, %v618
      %v621 = vadd.f32 %v613, %v618
      %v622 = vrot.slane %v620, 4
      %v623 = vrot.slane %v621, 4
      %v624 = vlaneseq
      %v625 = vshrl.u32 %v624, 7
      %vm626 = vcmp.lt.s32.totalorder %v625, 4
      %v627 = vsel %vm626, %v620, %v622
      %v628 = vsel %vm626, %v621, %v623
      %v629 = vsel %vm626, %v622, %v620
      %v630 = vsel %vm626, %v623, %v621
      %v631 = vand.u32 2147483647, %v629
      %vm632 = vcmp.le.f32.partialorder %v631, 0.7853982
      %vm633 = vcmp.lt.s32.totalorder %v629, 0
      %v634 = vand.u32 %v629, 2139095040
      %v635 = vshrl.u32 %v634, 23
      %v636 = vsub.s32 %v635, 127
      %v637 = vand.u32 2147483647, %v629
      %v638 = vand.u32 %v637, 8388607
      %v639 = vor.u32 %v638, 8388608
      %v640 = vsub.s32 0, %v639
      %v641 = vadd.s32 %v636, 1
      %vm642 = vcmp.gt.s32.totalorder %v641, 0
      %v643 = vsel %vm642, %v641, 0
      %v644 = vshrl.u32 %v643, 5
      %v645 = vand.u32 %v643, 31
      %v646 = vsub.s32 32, %v645
      %v647 = vshrl.u32 683565275, %v646
      %v648 = vshll.u32 683565275, %v645
      %v649 = vshrl.u32 2475754826, %v646
      %v650 = vor.u32 %v648, %v649
      %v651 = vshll.u32 2475754826, %v645
      %v652 = vshrl.u32 2131351028, %v646
      %v653 = vor.u32 %v651, %v652
      %v654 = vshll.u32 2131351028, %v645
      %v655 = vshrl.u32 2102212464, %v646
      %v656 = vor.u32 %v654, %v655
      %v657 = vshll.u32 2102212464, %v645
      %v658 = vshrl.u32 920167782, %v646
      %v659 = vor.u32 %v657, %v658
      %v660 = vshll.u32 920167782, %v645
      %v661 = vshrl.u32 1326507024, %v646
      %v662 = vor.u32 %v660, %v661
      %vm663 = vcmp.lt.s32.totalorder %v644, 1
      %vm664 = vcmp.lt.s32.totalorder %v644, 2
      %vm665 = vcmp.lt.s32.totalorder %v644, 3
      %vm666 = vcmp.lt.s32.totalorder %v644, 4
      %v667 = vsel %vm663, %v647, %v650
      %v668 = vsel %vm666, %v656, 2102212464
      %v669 = vsel %vm665, %v653, %v668
      %v670 = vsel %vm664, %v667, %v669
      %v671 = vsel %vm663, %v650, %v653
      %v672 = vsel %vm666, %v659, 920167782
      %v673 = vsel %vm665, %v656, %v672
      %v674 = vsel %vm664, %v671, %v673
      %v675 = vsel %vm663, %v653, %v656
      %v676 = vsel %vm666, %v662, 1326507024
      %v677 = vsel %vm665, %v659, %v676
      %v678 = vsel %vm664, %v675, %v677
      %v679 = vshll.u32 %v639, 8
      %v680 = vand.u32 %v679, 65535
      %v681 = vshrl.u32 %v679, 16
      %v682 = vand.u32 %v678, 65535
      %v683 = vshrl.u32 %v678, 16
      %v684 = vmul.u32 %v680, %v682
      %v685 = vmul.u32 %v680, %v683
      %v686 = vmul.u32 %v681, %v682
      %v687 = vmul.u32 %v681, %v683
      %v688 = vshll.u32 %v685, 16
      %v689 = vshrl.u32 %v685, 16
      %v690 = vshll.u32 %v686, 16
      %v691 = vshrl.u32 %v686, 16
      %vm692 = vc.u32 %v684, %v688
      %v693 = vsel %vm692, 1, 0
      %v694 = vadd.s32 %v684, %v688
      %v695 = vadd.s32 %v687, %v693
      %vm696 = vc.u32 %v694, %v690
      %v697 = vsel %vm696, 1, 0
      %v698 = vadd.s32 %v694, %v690
      %v699 = vadd.s32 %v695, %v697
      %v700 = vadd.s32 %v699, %v689
      %v701 = vadd.s32 %v700, %v691
      %v702 = vand.u32 %v679, 65535
      %v703 = vshrl.u32 %v679, 16
      %v704 = vand.u32 %v674, 65535
      %v705 = vshrl.u32 %v674, 16
      %v706 = vmul.u32 %v702, %v704
      %v707 = vmul.u32 %v702, %v705
      %v708 = vmul.u32 %v703, %v704
      %v709 = vmul.u32 %v703, %v705
      %v710 = vshll.u32 %v707, 16
      %v711 = vshrl.u32 %v707, 16
      %v712 = vshll.u32 %v708, 16
      %v713 = vshrl.u32 %v708, 16
      %vm714 = vc.u32 %v706, %v710
      %v715 = vsel %vm714, 1, 0
      %v716 = vadd.s32 %v706, %v710
      %v717 = vadd.s32 %v709, %v715
      %vm718 = vc.u32 %v716, %v712
      %v719 = vsel %vm718, 1, 0
      %v720 = vadd.s32 %v716, %v712
      %v721 = vadd.s32 %v717, %v719
      %v722 = vadd.s32 %v721, %v711
      %v723 = vadd.s32 %v722, %v713
      %v724 = vmul.u32 %v679, %v670
      %v725 = vadd.s32 %v701, %v720
      %vm726 = vc.u32 %v701, %v720
      %v727 = vadd.s32 %v723, 1
      %v728 = vsel %vm726, %v727, %v723
      %v729 = vadd.s32 %v724, %v728
      %v730 = vadd.s32 %v729, 536870912
      %v731 = vshrl.u32 %v730, 30
      %v732 = vshll.u32 %v731, 30
      %v733 = vsub.s32 %v729, %v732
      %vm734 = vcmp.lt.s32.totalorder %v733, 0
      %v735 = vsub.s32 0, %v733
      %v736 = vsel %vm734, %v735, %v733
      %v737 = vclz %v736
      %v738 = vsub.s32 %v737, 2
      %vm739 = vcmp.gt.s32.totalorder 0, %v738
      %v740 = vsel %vm739, 0, %v738
      %v741 = vsub.s32 32, %v740
      %v742 = vshll.u32 %v733, %v740
      %v743 = vshrl.u32 %v725, %v741
      %v744 = vor.u32 %v742, %v743
      %v745 = vsub.s32 4294967266, %v740
      %v746 = vadd.s32 %v745, 127
      %v747 = vshll.u32 %v746, 23
      %v748 = vor.u32 4788187, %v747
      %v749 = vand.u32 2147483647, %v748
      %v751 = vcvt.s32.f32 %v744
      %v752 = vmul.f32 %v751, %v749
      %v753 = vxor.u32 %v752, 2147483648
      %v754 = vsel %vm633, %v753, %v752
      %v755 = vsub.s32 4, %v731
      %v756 = vsel %vm633, %v755, %v731
      %v757 = vsel %vm632, %v629, %v754
      %v758 = vsel %vm632, 0, %v756
      %v759 = vmul.f32 %v757, %v757
      %v760 = vmul.f32 %v759, -0.001358992
      %v761 = vadd.f32 %v760, 0.041655596
      %v762 = vmul.f32 %v759, %v761
      %v763 = vadd.f32 %v762, -0.4999988
      %v764 = vmul.f32 %v759, %v763
      %v765 = vadd.f32 1.0, %v764
      %v766 = vmul.f32 %v757, %v757
      %v767 = vmul.f32 %v766, -0.00019511016
      %v768 = vadd.f32 %v767, 0.008332121
      %v769 = vmul.f32 %v766, %v768
      %v770 = vadd.f32 %v769, -0.16666654
      %v771 = vmul.f32 %v766, %v770
      %v772 = vadd.f32 %v771, 1.0
      %v773 = vmul.f32 %v772, %v757
      %vm774 = vweird.f32 %v629
      %v775 = vand.u32 %v758, 3
      %vm776 = vcmp.lt.s32.totalorder %v775, 2
      %vm777 = vcmp.eq.s32.totalorder %v775, 0
      %v778 = vxor.u32 %v773, 2147483648
      %v779 = vsel %vm777, %v765, %v778
      %vm780 = vcmp.eq.s32.totalorder %v775, 2
      %v781 = vxor.u32 %v765, 2147483648
      %v782 = vsel %vm780, %v781, %v773
      %v783 = vsel %vm776, %v779, %v782
      %v784 = vsel %vm774, nan, %v783
      %v785 = vand.u32 2147483647, %v630
      %vm786 = vcmp.le.f32.partialorder %v785, 0.7853982
      %vm787 = vcmp.lt.s32.totalorder %v630, 0
      %v788 = vand.u32 %v630, 2139095040
      %v789 = vshrl.u32 %v788, 23
      %v790 = vsub.s32 %v789, 127
      %v791 = vand.u32 2147483647, %v630
      %v792 = vand.u32 %v791, 8388607
      %v793 = vor.u32 %v792, 8388608
      %v794 = vsub.s32 0, %v793
      %v795 = vadd.s32 %v790, 1
      %vm796 = vcmp.gt.s32.totalorder %v795, 0
      %v797 = vsel %vm796, %v795, 0
      %v798 = vshrl.u32 %v797, 5
      %v799 = vand.u32 %v797, 31
      %v800 = vsub.s32 32, %v799
      %v801 = vshrl.u32 683565275, %v800
      %v802 = vshll.u32 683565275, %v799
      %v803 = vshrl.u32 2475754826, %v800
      %v804 = vor.u32 %v802, %v803
      %v805 = vshll.u32 2475754826, %v799
      %v806 = vshrl.u32 2131351028, %v800
      %v807 = vor.u32 %v805, %v806
      %v808 = vshll.u32 2131351028, %v799
      %v809 = vshrl.u32 2102212464, %v800
      %v810 = vor.u32 %v808, %v809
      %v811 = vshll.u32 2102212464, %v799
      %v812 = vshrl.u32 920167782, %v800
      %v813 = vor.u32 %v811, %v812
      %v814 = vshll.u32 920167782, %v799
      %v815 = vshrl.u32 1326507024, %v800
      %v816 = vor.u32 %v814, %v815
      %vm817 = vcmp.lt.s32.totalorder %v798, 1
      %vm818 = vcmp.lt.s32.totalorder %v798, 2
      %vm819 = vcmp.lt.s32.totalorder %v798, 3
      %vm820 = vcmp.lt.s32.totalorder %v798, 4
      %v821 = vsel %vm817, %v801, %v804
      %v822 = vsel %vm820, %v810, 2102212464
      %v823 = vsel %vm819, %v807, %v822
      %v824 = vsel %vm818, %v821, %v823
      %v825 = vsel %vm817, %v804, %v807
      %v826 = vsel %vm820, %v813, 920167782
      %v827 = vsel %vm819, %v810, %v826
      %v828 = vsel %vm818, %v825, %v827
      %v829 = vsel %vm817, %v807, %v810
      %v830 = vsel %vm820, %v816, 1326507024
      %v831 = vsel %vm819, %v813, %v830
      %v832 = vsel %vm818, %v829, %v831
      %v833 = vshll.u32 %v793, 8
      %v834 = vand.u32 %v833, 65535
      %v835 = vshrl.u32 %v833, 16
      %v836 = vand.u32 %v832, 65535
      %v837 = vshrl.u32 %v832, 16
      %v838 = vmul.u32 %v834, %v836
      %v839 = vmul.u32 %v834, %v837
      %v840 = vmul.u32 %v835, %v836
      %v841 = vmul.u32 %v835, %v837
      %v842 = vshll.u32 %v839, 16
      %v843 = vshrl.u32 %v839, 16
      %v844 = vshll.u32 %v840, 16
      %v845 = vshrl.u32 %v840, 16
      %vm846 = vc.u32 %v838, %v842
      %v847 = vsel %vm846, 1, 0
      %v848 = vadd.s32 %v838, %v842
      %v849 = vadd.s32 %v841, %v847
      %vm850 = vc.u32 %v848, %v844
      %v851 = vsel %vm850, 1, 0
      %v852 = vadd.s32 %v848, %v844
      %v853 = vadd.s32 %v849, %v851
      %v854 = vadd.s32 %v853, %v843
      %v855 = vadd.s32 %v854, %v845
      %v856 = vand.u32 %v833, 65535
      %v857 = vshrl.u32 %v833, 16
      %v858 = vand.u32 %v828, 65535
      %v859 = vshrl.u32 %v828, 16
      %v860 = vmul.u32 %v856, %v858
      %v861 = vmul.u32 %v856, %v859
      %v862 = vmul.u32 %v857, %v858
      %v863 = vmul.u32 %v857, %v859
      %v864 = vshll.u32 %v861, 16
      %v865 = vshrl.u32 %v861, 16
      %v866 = vshll.u32 %v862, 16
      %v867 = vshrl.u32 %v862, 16
      %vm868 = vc.u32 %v860, %v864
      %v869 = vsel %vm868, 1, 0
      %v870 = vadd.s32 %v860, %v864
      %v871 = vadd.s32 %v863, %v869
      %vm872 = vc.u32 %v870, %v866
      %v873 = vsel %vm872, 1, 0
      %v874 = vadd.s32 %v870, %v866
      %v875 = vadd.s32 %v871, %v873
      %v876 = vadd.s32 %v875, %v865
      %v877 = vadd.s32 %v876, %v867
      %v878 = vmul.u32 %v833, %v824
      %v879 = vadd.s32 %v855, %v874
      %vm880 = vc.u32 %v855, %v874
      %v881 = vadd.s32 %v877, 1
      %v882 = vsel %vm880, %v881, %v877
      %v883 = vadd.s32 %v878, %v882
      %v884 = vadd.s32 %v883, 536870912
      %v885 = vshrl.u32 %v884, 30
      %v886 = vshll.u32 %v885, 30
      %v887 = vsub.s32 %v883, %v886
      %vm888 = vcmp.lt.s32.totalorder %v887, 0
      %v889 = vsub.s32 0, %v887
      %v890 = vsel %vm888, %v889, %v887
      %v891 = vclz %v890
      %v892 = vsub.s32 %v891, 2
      %vm893 = vcmp.gt.s32.totalorder 0, %v892
      %v894 = vsel %vm893, 0, %v892
      %v895 = vsub.s32 32, %v894
      %v896 = vshll.u32 %v887, %v894
      %v897 = vshrl.u32 %v879, %v895
      %v898 = vor.u32 %v896, %v897
      %v899 = vsub.s32 4294967266, %v894
      %v900 = vadd.s32 %v899, 127
      %v901 = vshll.u32 %v900, 23
      %v902 = vor.u32 4788187, %v901
      %v903 = vand.u32 2147483647, %v902
      %v905 = vcvt.s32.f32 %v898
      %v906 = vmul.f32 %v905, %v903
      %v907 = vxor.u32 %v906, 2147483648
      %v908 = vsel %vm787, %v907, %v906
      %v909 = vsub.s32 4, %v885
      %v910 = vsel %vm787, %v909, %v885
      %v911 = vsel %vm786, %v630, %v908
      %v912 = vsel %vm786, 0, %v910
      %v913 = vmul.f32 %v911, %v911
      %v914 = vmul.f32 %v913, -0.001358992
      %v915 = vadd.f32 %v914, 0.041655596
      %v916 = vmul.f32 %v913, %v915
      %v917 = vadd.f32 %v916, -0.4999988
      %v918 = vmul.f32 %v913, %v917
      %v919 = vadd.f32 1.0, %v918
      %v920 = vmul.f32 %v911, %v911
      %v921 = vmul.f32 %v920, -0.00019511016
      %v922 = vadd.f32 %v921, 0.008332121
      %v923 = vmul.f32 %v920, %v922
      %v924 = vadd.f32 %v923, -0.16666654
      %v925 = vmul.f32 %v920, %v924
      %v926 = vadd.f32 %v925, 1.0
      %v927 = vmul.f32 %v926, %v911
      %vm928 = vweird.f32 %v630
      %v929 = vand.u32 %v912, 3
      %vm930 = vcmp.lt.s32.totalorder %v929, 2
      %vm931 = vcmp.eq.s32.totalorder %v929, 0
      %v932 = vxor.u32 %v927, 2147483648
      %v933 = vsel %vm931, %v919, %v932
      %vm934 = vcmp.eq.s32.totalorder %v929, 2
      %v935 = vxor.u32 %v919, 2147483648
      %v936 = vsel %vm934, %v935, %v927
      %v937 = vsel %vm930, %v933, %v936
      %v938 = vsel %vm928, nan, %v937
      %v939 = vand.u32 2147483647, %v629
      %vm940 = vcmp.le.f32.partialorder %v939, 0.7853982
      %vm941 = vcmp.lt.s32.totalorder %v629, 0
      %v942 = vand.u32 %v629, 2139095040
      %v943 = vshrl.u32 %v942, 23
      %v944 = vsub.s32 %v943, 127
      %v945 = vand.u32 2147483647, %v629
      %v946 = vand.u32 %v945, 8388607
      %v947 = vor.u32 %v946, 8388608
      %v948 = vsub.s32 0, %v947
      %v949 = vadd.s32 %v944, 1
      %vm950 = vcmp.gt.s32.totalorder %v949, 0
      %v951 = vsel %vm950, %v949, 0
      %v952 = vshrl.u32 %v951, 5
      %v953 = vand.u32 %v951, 31
      %v954 = vsub.s32 32, %v953
      %v955 = vshrl.u32 683565275, %v954
      %v956 = vshll.u32 683565275, %v953
      %v957 = vshrl.u32 2475754826, %v954
      %v958 = vor.u32 %v956, %v957
      %v959 = vshll.u32 2475754826, %v953
      %v960 = vshrl.u32 2131351028, %v954
      %v961 = vor.u32 %v959, %v960
      %v962 = vshll.u32 2131351028, %v953
      %v963 = vshrl.u32 2102212464, %v954
      %v964 = vor.u32 %v962, %v963
      %v965 = vshll.u32 2102212464, %v953
      %v966 = vshrl.u32 920167782, %v954
      %v967 = vor.u32 %v965, %v966
      %v968 = vshll.u32 920167782, %v953
      %v969 = vshrl.u32 1326507024, %v954
      %v970 = vor.u32 %v968, %v969
      %vm971 = vcmp.lt.s32.totalorder %v952, 1
      %vm972 = vcmp.lt.s32.totalorder %v952, 2
      %vm973 = vcmp.lt.s32.totalorder %v952, 3
      %vm974 = vcmp.lt.s32.totalorder %v952, 4
      %v975 = vsel %vm971, %v955, %v958
      %v976 = vsel %vm974, %v964, 2102212464
      %v977 = vsel %vm973, %v961, %v976
      %v978 = vsel %vm972, %v975, %v977
      %v979 = vsel %vm971, %v958, %v961
      %v980 = vsel %vm974, %v967, 920167782
      %v981 = vsel %vm973, %v964, %v980
      %v982 = vsel %vm972, %v979, %v981
      %v983 = vsel %vm971, %v961, %v964
      %v984 = vsel %vm974, %v970, 1326507024
      %v985 = vsel %vm973, %v967, %v984
      %v986 = vsel %vm972, %v983, %v985
      %v987 = vshll.u32 %v947, 8
      %v988 = vand.u32 %v987, 65535
      %v989 = vshrl.u32 %v987, 16
      %v990 = vand.u32 %v986, 65535
      %v991 = vshrl.u32 %v986, 16
      %v992 = vmul.u32 %v988, %v990
      %v993 = vmul.u32 %v988, %v991
      %v994 = vmul.u32 %v989, %v990
      %v995 = vmul.u32 %v989, %v991
      %v996 = vshll.u32 %v993, 16
      %v997 = vshrl.u32 %v993, 16
      %v998 = vshll.u32 %v994, 16
      %v999 = vshrl.u32 %v994, 16
      %vm1000 = vc.u32 %v992, %v996
      %v1001 = vsel %vm1000, 1, 0
      %v1002 = vadd.s32 %v992, %v996
      %v1003 = vadd.s32 %v995, %v1001
      %vm1004 = vc.u32 %v1002, %v998
      %v1005 = vsel %vm1004, 1, 0
      %v1006 = vadd.s32 %v1002, %v998
      %v1007 = vadd.s32 %v1003, %v1005
      %v1008 = vadd.s32 %v1007, %v997
      %v1009 = vadd.s32 %v1008, %v999
      %v1010 = vand.u32 %v987, 65535
      %v1011 = vshrl.u32 %v987, 16
      %v1012 = vand.u32 %v982, 65535
      %v1013 = vshrl.u32 %v982, 16
      %v1014 = vmul.u32 %v1010, %v1012
      %v1015 = vmul.u32 %v1010, %v1013
      %v1016 = vmul.u32 %v1011, %v1012
      %v1017 = vmul.u32 %v1011, %v1013
      %v1018 = vshll.u32 %v1015, 16
      %v1019 = vshrl.u32 %v1015, 16
      %v1020 = vshll.u32 %v1016, 16
      %v1021 = vshrl.u32 %v1016, 16
      %vm1022 = vc.u32 %v1014, %v1018
      %v1023 = vsel %vm1022, 1, 0
      %v1024 = vadd.s32 %v1014, %v1018
      %v1025 = vadd.s32 %v1017, %v1023
      %vm1026 = vc.u32 %v1024, %v1020
      %v1027 = vsel %vm1026, 1, 0
      %v1028 = vadd.s32 %v1024, %v1020
      %v1029 = vadd.s32 %v1025, %v1027
      %v1030 = vadd.s32 %v1029, %v1019
      %v1031 = vadd.s32 %v1030, %v1021
      %v1032 = vmul.u32 %v987, %v978
      %v1033 = vadd.s32 %v1009, %v1028
      %vm1034 = vc.u32 %v1009, %v1028
      %v1035 = vadd.s32 %v1031, 1
      %v1036 = vsel %vm1034, %v1035, %v1031
      %v1037 = vadd.s32 %v1032, %v1036
      %v1038 = vadd.s32 %v1037, 536870912
      %v1039 = vshrl.u32 %v1038, 30
      %v1040 = vshll.u32 %v1039, 30
      %v1041 = vsub.s32 %v1037, %v1040
      %vm1042 = vcmp.lt.s32.totalorder %v1041, 0
      %v1043 = vsub.s32 0, %v1041
      %v1044 = vsel %vm1042, %v1043, %v1041
      %v1045 = vclz %v1044
      %v1046 = vsub.s32 %v1045, 2
      %vm1047 = vcmp.gt.s32.totalorder 0, %v1046
      %v1048 = vsel %vm1047, 0, %v1046
      %v1049 = vsub.s32 32, %v1048
      %v1050 = vshll.u32 %v1041, %v1048
      %v1051 = vshrl.u32 %v1033, %v1049
      %v1052 = vor.u32 %v1050, %v1051
      %v1053 = vsub.s32 4294967266, %v1048
      %v1054 = vadd.s32 %v1053, 127
      %v1055 = vshll.u32 %v1054, 23
      %v1056 = vor.u32 4788187, %v1055
      %v1057 = vand.u32 2147483647, %v1056
      %v1059 = vcvt.s32.f32 %v1052
      %v1060 = vmul.f32 %v1059, %v1057
      %v1061 = vxor.u32 %v1060, 2147483648
      %v1062 = vsel %vm941, %v1061, %v1060
      %v1063 = vsub.s32 4, %v1039
      %v1064 = vsel %vm941, %v1063, %v1039
      %v1065 = vsel %vm940, %v629, %v1062
      %v1066 = vsel %vm940, 0, %v1064
      %v1067 = vmul.f32 %v1065, %v1065
      %v1068 = vmul.f32 %v1067, -0.001358992
      %v1069 = vadd.f32 %v1068, 0.041655596
      %v1070 = vmul.f32 %v1067, %v1069
      %v1071 = vadd.f32 %v1070, -0.4999988
      %v1072 = vmul.f32 %v1067, %v1071
      %v1073 = vadd.f32 1.0, %v1072
      %v1074 = vmul.f32 %v1065, %v1065
      %v1075 = vmul.f32 %v1074, -0.00019511016
      %v1076 = vadd.f32 %v1075, 0.008332121
      %v1077 = vmul.f32 %v1074, %v1076
      %v1078 = vadd.f32 %v1077, -0.16666654
      %v1079 = vmul.f32 %v1074, %v1078
      %v1080 = vadd.f32 %v1079, 1.0
      %v1081 = vmul.f32 %v1080, %v1065
      %vm1082 = vweird.f32 %v629
      %v1083 = vadd.s32 %v1066, 3
      %v1084 = vand.u32 %v1083, 3
      %vm1085 = vcmp.lt.s32.totalorder %v1084, 2
      %vm1086 = vcmp.eq.s32.totalorder %v1084, 0
      %v1087 = vxor.u32 %v1081, 2147483648
      %v1088 = vsel %vm1086, %v1073, %v1087
      %vm1089 = vcmp.eq.s32.totalorder %v1084, 2
      %v1090 = vxor.u32 %v1073, 2147483648
      %v1091 = vsel %vm1089, %v1090, %v1081
      %v1092 = vsel %vm1085, %v1088, %v1091
      %v1093 = vsel %vm1082, nan, %v1092
      %v1094 = vand.u32 2147483647, %v630
      %vm1095 = vcmp.le.f32.partialorder %v1094, 0.7853982
      %vm1096 = vcmp.lt.s32.totalorder %v630, 0
      %v1097 = vand.u32 %v630, 2139095040
      %v1098 = vshrl.u32 %v1097, 23
      %v1099 = vsub.s32 %v1098, 127
      %v1100 = vand.u32 2147483647, %v630
      %v1101 = vand.u32 %v1100, 8388607
      %v1102 = vor.u32 %v1101, 8388608
      %v1103 = vsub.s32 0, %v1102
      %v1104 = vadd.s32 %v1099, 1
      %vm1105 = vcmp.gt.s32.totalorder %v1104, 0
      %v1106 = vsel %vm1105, %v1104, 0
      %v1107 = vshrl.u32 %v1106, 5
      %v1108 = vand.u32 %v1106, 31
      %v1109 = vsub.s32 32, %v1108
      %v1110 = vshrl.u32 683565275, %v1109
      %v1111 = vshll.u32 683565275, %v1108
      %v1112 = vshrl.u32 2475754826, %v1109
      %v1113 = vor.u32 %v1111, %v1112
      %v1114 = vshll.u32 2475754826, %v1108
      %v1115 = vshrl.u32 2131351028, %v1109
      %v1116 = vor.u32 %v1114, %v1115
      %v1117 = vshll.u32 2131351028, %v1108
      %v1118 = vshrl.u32 2102212464, %v1109
      %v1119 = vor.u32 %v1117, %v1118
      %v1120 = vshll.u32 2102212464, %v1108
      %v1121 = vshrl.u32 920167782, %v1109
      %v1122 = vor.u32 %v1120, %v1121
      %v1123 = vshll.u32 920167782, %v1108
      %v1124 = vshrl.u32 1326507024, %v1109
      %v1125 = vor.u32 %v1123, %v1124
      %vm1126 = vcmp.lt.s32.totalorder %v1107, 1
      %vm1127 = vcmp.lt.s32.totalorder %v1107, 2
      %vm1128 = vcmp.lt.s32.totalorder %v1107, 3
      %vm1129 = vcmp.lt.s32.totalorder %v1107, 4
      %v1130 = vsel %vm1126, %v1110, %v1113
      %v1131 = vsel %vm1129, %v1119, 2102212464
      %v1132 = vsel %vm1128, %v1116, %v1131
      %v1133 = vsel %vm1127, %v1130, %v1132
      %v1134 = vsel %vm1126, %v1113, %v1116
      %v1135 = vsel %vm1129, %v1122, 920167782
      %v1136 = vsel %vm1128, %v1119, %v1135
      %v1137 = vsel %vm1127, %v1134, %v1136
      %v1138 = vsel %vm1126, %v1116, %v1119
      %v1139 = vsel %vm1129, %v1125, 1326507024
      %v1140 = vsel %vm1128, %v1122, %v1139
      %v1141 = vsel %vm1127, %v1138, %v1140
      %v1142 = vshll.u32 %v1102, 8
      %v1143 = vand.u32 %v1142, 65535
      %v1144 = vshrl.u32 %v1142, 16
      %v1145 = vand.u32 %v1141, 65535
      %v1146 = vshrl.u32 %v1141, 16
      %v1147 = vmul.u32 %v1143, %v1145
      %v1148 = vmul.u32 %v1143, %v1146
      %v1149 = vmul.u32 %v1144, %v1145
      %v1150 = vmul.u32 %v1144, %v1146
      %v1151 = vshll.u32 %v1148, 16
      %v1152 = vshrl.u32 %v1148, 16
      %v1153 = vshll.u32 %v1149, 16
      %v1154 = vshrl.u32 %v1149, 16
      %vm1155 = vc.u32 %v1147, %v1151
      %v1156 = vsel %vm1155, 1, 0
      %v1157 = vadd.s32 %v1147, %v1151
      %v1158 = vadd.s32 %v1150, %v1156
      %vm1159 = vc.u32 %v1157, %v1153
      %v1160 = vsel %vm1159, 1, 0
      %v1161 = vadd.s32 %v1157, %v1153
      %v1162 = vadd.s32 %v1158, %v1160
      %v1163 = vadd.s32 %v1162, %v1152
      %v1164 = vadd.s32 %v1163, %v1154
      %v1165 = vand.u32 %v1142, 65535
      %v1166 = vshrl.u32 %v1142, 16
      %v1167 = vand.u32 %v1137, 65535
      %v1168 = vshrl.u32 %v1137, 16
      %v1169 = vmul.u32 %v1165, %v1167
      %v1170 = vmul.u32 %v1165, %v1168
      %v1171 = vmul.u32 %v1166, %v1167
      %v1172 = vmul.u32 %v1166, %v1168
      %v1173 = vshll.u32 %v1170, 16
      %v1174 = vshrl.u32 %v1170, 16
      %v1175 = vshll.u32 %v1171, 16
      %v1176 = vshrl.u32 %v1171, 16
      %vm1177 = vc.u32 %v1169, %v1173
      %v1178 = vsel %vm1177, 1, 0
      %v1179 = vadd.s32 %v1169, %v1173
      %v1180 = vadd.s32 %v1172, %v1178
      %vm1181 = vc.u32 %v1179, %v1175
      %v1182 = vsel %vm1181, 1, 0
      %v1183 = vadd.s32 %v1179, %v1175
      %v1184 = vadd.s32 %v1180, %v1182
      %v1185 = vadd.s32 %v1184, %v1174
      %v1186 = vadd.s32 %v1185, %v1176
      %v1187 = vmul.u32 %v1142, %v1133
      %v1188 = vadd.s32 %v1164, %v1183
      %vm1189 = vc.u32 %v1164, %v1183
      %v1190 = vadd.s32 %v1186, 1
      %v1191 = vsel %vm1189, %v1190, %v1186
      %v1192 = vadd.s32 %v1187, %v1191
      %v1193 = vadd.s32 %v1192, 536870912
      %v1194 = vshrl.u32 %v1193, 30
      %v1195 = vshll.u32 %v1194, 30
      %v1196 = vsub.s32 %v1192, %v1195
      %vm1197 = vcmp.lt.s32.totalorder %v1196, 0
      %v1198 = vsub.s32 0, %v1196
      %v1199 = vsel %vm1197, %v1198, %v1196
      %v1200 = vclz %v1199
      %v1201 = vsub.s32 %v1200, 2
      %vm1202 = vcmp.gt.s32.totalorder 0, %v1201
      %v1203 = vsel %vm1202, 0, %v1201
      %v1204 = vsub.s32 32, %v1203
      %v1205 = vshll.u32 %v1196, %v1203
      %v1206 = vshrl.u32 %v1188, %v1204
      %v1207 = vor.u32 %v1205, %v1206
      %v1208 = vsub.s32 4294967266, %v1203
      %v1209 = vadd.s32 %v1208, 127
      %v1210 = vshll.u32 %v1209, 23
      %v1211 = vor.u32 4788187, %v1210
      %v1212 = vand.u32 2147483647, %v1211
      %v1214 = vcvt.s32.f32 %v1207
      %v1215 = vmul.f32 %v1214, %v1212
      %v1216 = vxor.u32 %v1215, 2147483648
      %v1217 = vsel %vm1096, %v1216, %v1215
      %v1218 = vsub.s32 4, %v1194
      %v1219 = vsel %vm1096, %v1218, %v1194
      %v1220 = vsel %vm1095, %v630, %v1217
      %v1221 = vsel %vm1095, 0, %v1219
      %v1222 = vmul.f32 %v1220, %v1220
      %v1223 = vmul.f32 %v1222, -0.001358992
      %v1224 = vadd.f32 %v1223, 0.041655596
      %v1225 = vmul.f32 %v1222, %v1224
      %v1226 = vadd.f32 %v1225, -0.4999988
      %v1227 = vmul.f32 %v1222, %v1226
      %v1228 = vadd.f32 1.0, %v1227
      %v1229 = vmul.f32 %v1220, %v1220
      %v1230 = vmul.f32 %v1229, -0.00019511016
      %v1231 = vadd.f32 %v1230, 0.008332121
      %v1232 = vmul.f32 %v1229, %v1231
      %v1233 = vadd.f32 %v1232, -0.16666654
      %v1234 = vmul.f32 %v1229, %v1233
      %v1235 = vadd.f32 %v1234, 1.0
      %v1236 = vmul.f32 %v1235, %v1220
      %vm1237 = vweird.f32 %v630
      %v1238 = vadd.s32 %v1221, 3
      %v1239 = vand.u32 %v1238, 3
      %vm1240 = vcmp.lt.s32.totalorder %v1239, 2
      %vm1241 = vcmp.eq.s32.totalorder %v1239, 0
      %v1242 = vxor.u32 %v1236, 2147483648
      %v1243 = vsel %vm1241, %v1228, %v1242
      %vm1244 = vcmp.eq.s32.totalorder %v1239, 2
      %v1245 = vxor.u32 %v1228, 2147483648
      %v1246 = vsel %vm1244, %v1245, %v1236
      %v1247 = vsel %vm1240, %v1243, %v1246
      %v1248 = vsel %vm1237, nan, %v1247
      %v1249 = vsel %vm626, %v784, %v1093
      %v1250 = vsel %vm626, %v938, %v1248
      %v1251 = vsel %vm626, 2e-08, 1e-08
      %v1252 = vmul.f32 %v627, %v1249
      %v1253 = vmul.f32 %v628, %v1250
      %v1254 = vadd.f32 %v1252, %v1251
      %v1255 = vadd.f32 %v1253, %v1251
      %1256 = vst [vmem:[%s352] sm:$0xff] %v1254
      %1257 = vst [vmem:[%s352 + $0x8] sm:$0xff] %v1255
      %s1258 = smul.u32 2, %s23
      %p1259 = scmp.lt.s32.totalorder %s22, 1
      %s1260 = scalar_select %p1259, %s22, 1
      %p1261 = scmp.lt.s32.totalorder %s1258, 1
      %s1262 = scalar_select %p1261, %s1258, 1
      %s1263 = smul.addr %s1260, 2
      %s1264 = sadd.s32 %s1262, %s1263
      %s1265 = smul.addr %s1264, 8
      %s1266 = scalar_lea.vmem %s7, %s1265
      // Predicated region
      $region49: #{freprocess.4} parent=47 // pred_check
        %p1267 = pneg %p211
      $region50: #{freprocess.4} parent=47 // pred_check_branch
        %1269 = sbr.rel (%p1267) target = $region52
      $region51: #{freprocess.4} parent=47 // pred_region
        %s1270 = smul.u32 2, %s23
      $region52: #{freprocess.4} parent=47 // pred_fallthru
        _
    $region48: #{freprocess.4} parent=5 // pred_fallthru
      _
    %p1271 = scmp.le.s32.totalorder 2, %s13
    // Predicated region
    $region53: #{freprocess.4} parent=5 // pred_check
      %p1272 = pneg %p1271
    $region54: #{freprocess.4} parent=5 // pred_check_branch
      %1274 = sbr.rel (%p1272) target = $region56
    $region55: #{freprocess.4} parent=5 // pred_region
      %s1275 = ssub.s32 %s13, 2
      // Predicated region
      $region57: #{freprocess.4} parent=55 // pred_check
        %p1276 = pneg %p217
      $region58: #{freprocess.4} parent=55 // pred_check_branch
        %1278 = sbr.rel (%p1276) target = $region60
      $region59: #{freprocess.4} parent=55 // pred_region
        %s1279 = smul.u32 2, %s25
        %p1280 = scmp.lt.s32.totalorder %s24, 1
        %s1281 = scalar_select %p1280, %s24, 1
        %p1282 = scmp.lt.s32.totalorder %s1279, 1
        %s1283 = scalar_select %p1282, %s1279, 1
        %s1284 = smul.addr %s1281, 2
        %s1285 = sadd.s32 %s1283, %s1284
        %s1286 = smul.addr %s1285, 8
        %s1287 = scalar_lea.vmem %s7, %s1286
      $region60: #{freprocess.4} parent=55 // pred_fallthru
        _
    $region56: #{freprocess.4} parent=5 // pred_fallthru
      _
  $region6: #{freprocess.4} parent=0 // loop_footer
    %s17 = sadd.s32 1, %s13
  $region7: #{freprocess.4} parent=0 // loop_footer_branch
    %12 = sbr.rel target = $region3
  $region8: #{freprocess.4} parent=0 // loop_exit
    _

// kernel: reverse.0
$region0: #{reverse.0}
  %s0 = inlined_call_operand.vmem [shape: f32[2,4,16,7], index: 0, kind: input, shape index: {}]
  %s1 = inlined_call_operand.vmem [shape: f32[2,4,16,7], index: 1, kind: output, shape index: {}]
  $region1: #{reverse.0} parent=0
    #allocation0 [shape = 'u8[65536]{0}', space=vmem, size = 0x10000, scoped, tag = 'operand span for operand 0']
    #allocation1 [shape = 'u8[32768]{0}', space=vmem, size = 0x8000, scoped, tag = 'operand span for operand 1']
    %s2 = scalar_lea.vmem [#allocation0], 8
    // Predicated region
    $region2: #{reverse.0} parent=1 // pred_check
      _
    $region3: #{reverse.0} parent=1 // pred_check_branch
      %4 = sbr.rel (0) target = $region5
    $region4: #{reverse.0} parent=1 // pred_region
      // Predicated region
      $region6: #{reverse.0} parent=4 // pred_check
        _
      $region7: #{reverse.0} parent=4 // pred_check_branch
        %6 = sbr.rel (0) target = $region9
      $region8: #{reverse.0} parent=4 // pred_region
        // Predicated region
        $region21: #{reverse.0} parent=8 // pred_check
          _
        $region22: #{reverse.0} parent=8 // pred_check_branch
          %36 = sbr.rel (0) target = $region24
        $region23: #{reverse.0} parent=8 // pred_region
          loop: start=0, step=1, limit=1
          $region25: #{reverse.0} parent=23 // loop_pre_header
            _
          $region26: #{reverse.0} parent=23 // loop_header
            %s38 = sphi 0, %s42
            %p39 = scmp.ge.s32.totalorder %s38, 1
            %s43 = sphi %s0, %s0
            %s44 = sphi %s2, %s2
          $region27: #{reverse.0} parent=23 // loop_header_branch
            %41 = sbr.rel (%p39) target = $region31
          $region28: #{reverse.0} parent=23 // loop_body
            %v45 = vld [vmem:[%s43] sm:$0xff]
            %46 = vst [vmem:[%s44] sm:$0xff] %v45
            %v47 = vld [vmem:[%s43 + $0x8] sm:$0xff]
            %48 = vst [vmem:[%s44 + $0x10] sm:$0xff] %v47
            %v49 = vld [vmem:[%s43 + $0x10] sm:$0xff]
            %50 = vst [vmem:[%s44 + $0x20] sm:$0xff] %v49
            %v51 = vld [vmem:[%s43 + $0x18] sm:$0xff]
            %52 = vst [vmem:[%s44 + $0x30] sm:$0xff] %v51
            %v53 = vld [vmem:[%s43 + $0x20] sm:$0xff]
            %54 = vst [vmem:[%s44 + $0x40] sm:$0xff] %v53
            %v55 = vld [vmem:[%s43 + $0x28] sm:$0xff]
            %56 = vst [vmem:[%s44 + $0x50] sm:$0xff] %v55
            %v57 = vld [vmem:[%s43 + $0x30] sm:$0xff]
            %58 = vst [vmem:[%s44 + $0x60] sm:$0xff] %v57
            %v59 = vld [vmem:[%s43 + $0x38] sm:$0xff]
            %60 = vst [vmem:[%s44 + $0x70] sm:$0xff] %v59
          $region29: #{reverse.0} parent=23 // loop_footer
            %s42 = sadd.s32 1, %s38
          $region30: #{reverse.0} parent=23 // loop_footer_branch
            %37 = sbr.rel target = $region26
          $region31: #{reverse.0} parent=23 // loop_exit
            _
        $region24: #{reverse.0} parent=8 // pred_fallthru
          _
        // Predicated region
        $region32: #{reverse.0} parent=8 // pred_check
          _
        $region33: #{reverse.0} parent=8 // pred_check_branch
          %62 = sbr.rel target = $region35
        $region34: #{reverse.0} parent=8 // pred_region
          _
        $region35: #{reverse.0} parent=8 // pred_fallthru
          _
      $region9: #{reverse.0} parent=4 // pred_fallthru
        _
      // Predicated region
      $region10: #{reverse.0} parent=4 // pred_check
        _
      $region11: #{reverse.0} parent=4 // pred_check_branch
        %8 = sbr.rel target = $region13
      $region12: #{reverse.0} parent=4 // pred_region
        %s10 = ssub.s32 256, 1
        loop: start=0, step=1, limit=1
        $region14: #{reverse.0} parent=12 // loop_pre_header
          _
        $region15: #{reverse.0} parent=12 // loop_header
          %s12 = sphi 0, %s16
          %p13 = scmp.ge.s32.totalorder %s12, 1
          %s17 = sphi %s0, %s0
          %s18 = sphi %s2, %s2
        $region16: #{reverse.0} parent=12 // loop_header_branch
          %15 = sbr.rel (%p13) target = $region20
        $region17: #{reverse.0} parent=12 // loop_body
          %v19 = vld [vmem:[%s17] sm:%s10]
          %20 = vst [vmem:[%s18] sm:%s10] %v19
          %v21 = vld [vmem:[%s17 + $0x8] sm:%s10]
          %22 = vst [vmem:[%s18 + $0x10] sm:%s10] %v21
          %v23 = vld [vmem:[%s17 + $0x10] sm:%s10]
          %24 = vst [vmem:[%s18 + $0x20] sm:%s10] %v23
          %v25 = vld [vmem:[%s17 + $0x18] sm:%s10]
          %26 = vst [vmem:[%s18 + $0x30] sm:%s10] %v25
          %v27 = vld [vmem:[%s17 + $0x20] sm:%s10]
          %28 = vst [vmem:[%s18 + $0x40] sm:%s10] %v27
          %v29 = vld [vmem:[%s17 + $0x28] sm:%s10]
          %30 = vst [vmem:[%s18 + $0x50] sm:%s10] %v29
          %v31 = vld [vmem:[%s17 + $0x30] sm:%s10]
          %32 = vst [vmem:[%s18 + $0x60] sm:%s10] %v31
          %v33 = vld [vmem:[%s17 + $0x38] sm:%s10]
          %34 = vst [vmem:[%s18 + $0x70] sm:%s10] %v33
        $region18: #{reverse.0} parent=12 // loop_footer
          %s16 = sadd.s32 1, %s12
        $region19: #{reverse.0} parent=12 // loop_footer_branch
          %11 = sbr.rel target = $region15
        $region20: #{reverse.0} parent=12 // loop_exit
          _
      $region13: #{reverse.0} parent=4 // pred_fallthru
        _
    $region5: #{reverse.0} parent=1 // pred_fallthru
      _
    %63 = vnop
    %s64 = scalar_lea.vmem [#allocation0], 7
    %v65 = vld [vmem:[%s64] ss:$-1 sm:$0xff]
    %v66 = vrot.slane %v65, 1
    %67 = vst [vmem:[#allocation1] sm:$0xff] %v66
    %s68 = scalar_lea.vmem [#allocation0], 8
    %s69 = scalar_lea.vmem %s68, 7 [#allocation0]
    %v70 = vld [vmem:[%s69] ss:$-1 sm:$0xff]
    %v71 = vrot.slane %v70, 1
    %v72 = vlaneseq
    %v73 = vshrl.u32 %v72, 7
    %vm74 = vcmp.lt.s32.totalorder %v73, 7
    %75 = vst.msk [vmem:[#allocation1] sm:$0xff] %vm74, %v71
    %s76 = scalar_lea.vmem [#allocation1], 8
    %s77 = scalar_lea.vmem [#allocation0], 16
    %s78 = scalar_lea.vmem %s77, 7 [#allocation0]
    %v79 = vld [vmem:[%s78] ss:$-1 sm:$0xff]
    %v80 = vrot.slane %v79, 1
    %81 = vst [vmem:[%s76] sm:$0xff] %v80
    %s82 = scalar_lea.vmem %s77, 8 [#allocation0]
    %s83 = scalar_lea.vmem %s82, 7 [#allocation0]
    %v84 = vld [vmem:[%s83] ss:$-1 sm:$0xff]
    %v85 = vrot.slane %v84, 1
    %v86 = vlaneseq
    %v87 = vshrl.u32 %v86, 7
    %vm88 = vcmp.lt.s32.totalorder %v87, 7
    %89 = vst.msk [vmem:[%s76] sm:$0xff] %vm88, %v85
    %s90 = scalar_lea.vmem [#allocation1], 16
    %s91 = scalar_lea.vmem [#allocation0], 32
    %s92 = scalar_lea.vmem %s91, 7 [#allocation0]
    %v93 = vld [vmem:[%s92] ss:$-1 sm:$0xff]
    %v94 = vrot.slane %v93, 1
    %95 = vst [vmem:[%s90] sm:$0xff] %v94
    %s96 = scalar_lea.vmem %s91, 8 [#allocation0]
    %s97 = scalar_lea.vmem %s96, 7 [#allocation0]
    %v98 = vld [vmem:[%s97] ss:$-1 sm:$0xff]
    %v99 = vrot.slane %v98, 1
    %v100 = vlaneseq
    %v101 = vshrl.u32 %v100, 7
    %vm102 = vcmp.lt.s32.totalorder %v101, 7
    %103 = vst.msk [vmem:[%s90] sm:$0xff] %vm102, %v99
    %s104 = scalar_lea.vmem [#allocation1], 24
    %s105 = scalar_lea.vmem [#allocation0], 48
    %s106 = scalar_lea.vmem %s105, 7 [#allocation0]
    %v107 = vld [vmem:[%s106] ss:$-1 sm:$0xff]
    %v108 = vrot.slane %v107, 1
    %109 = vst [vmem:[%s104] sm:$0xff] %v108
    %s110 = scalar_lea.vmem %s105, 8 [#allocation0]
    %s111 = scalar_lea.vmem %s110, 7 [#allocation0]
    %v112 = vld [vmem:[%s111] ss:$-1 sm:$0xff]
    %v113 = vrot.slane %v112, 1
    %v114 = vlaneseq
    %v115 = vshrl.u32 %v114, 7
    %vm116 = vcmp.lt.s32.totalorder %v115, 7
    %117 = vst.msk [vmem:[%s104] sm:$0xff] %vm116, %v113
    %s118 = scalar_lea.vmem [#allocation1], 32
    %s119 = scalar_lea.vmem [#allocation0], 64
    %s120 = scalar_lea.vmem %s119, 7 [#allocation0]
    %v121 = vld [vmem:[%s120] ss:$-1 sm:$0xff]
    %v122 = vrot.slane %v121, 1
    %123 = vst [vmem:[%s118] sm:$0xff] %v122
    %s124 = scalar_lea.vmem %s119, 8 [#allocation0]
    %s125 = scalar_lea.vmem %s124, 7 [#allocation0]
    %v126 = vld [vmem:[%s125] ss:$-1 sm:$0xff]
    %v127 = vrot.slane %v126, 1
    %v128 = vlaneseq
    %v129 = vshrl.u32 %v128, 7
    %vm130 = vcmp.lt.s32.totalorder %v129, 7
    %131 = vst.msk [vmem:[%s118] sm:$0xff] %vm130, %v127
    %s132 = scalar_lea.vmem [#allocation1], 40
    %s133 = scalar_lea.vmem [#allocation0], 80
    %s134 = scalar_lea.vmem %s133, 7 [#allocation0]
    %v135 = vld [vmem:[%s134] ss:$-1 sm:$0xff]
    %v136 = vrot.slane %v135, 1
    %137 = vst [vmem:[%s132] sm:$0xff] %v136
    %s138 = scalar_lea.vmem %s133, 8 [#allocation0]
    %s139 = scalar_lea.vmem %s138, 7 [#allocation0]
    %v140 = vld [vmem:[%s139] ss:$-1 sm:$0xff]
    %v141 = vrot.slane %v140, 1
    %v142 = vlaneseq
    %v143 = vshrl.u32 %v142, 7
    %vm144 = vcmp.lt.s32.totalorder %v143, 7
    %145 = vst.msk [vmem:[%s132] sm:$0xff] %vm144, %v141
    %s146 = scalar_lea.vmem [#allocation1], 48
    %s147 = scalar_lea.vmem [#allocation0], 96
    %s148 = scalar_lea.vmem %s147, 7 [#allocation0]
    %v149 = vld [vmem:[%s148] ss:$-1 sm:$0xff]
    %v150 = vrot.slane %v149, 1
    %151 = vst [vmem:[%s146] sm:$0xff] %v150
    %s152 = scalar_lea.vmem %s147, 8 [#allocation0]
    %s153 = scalar_lea.vmem %s152, 7 [#allocation0]
    %v154 = vld [vmem:[%s153] ss:$-1 sm:$0xff]
    %v155 = vrot.slane %v154, 1
    %v156 = vlaneseq
    %v157 = vshrl.u32 %v156, 7
    %vm158 = vcmp.lt.s32.totalorder %v157, 7
    %159 = vst.msk [vmem:[%s146] sm:$0xff] %vm158, %v155
    %s160 = scalar_lea.vmem [#allocation1], 56
    %s161 = scalar_lea.vmem [#allocation0], 112
    %s162 = scalar_lea.vmem %s161, 7 [#allocation0]
    %v163 = vld [vmem:[%s162] ss:$-1 sm:$0xff]
    %v164 = vrot.slane %v163, 1
    %165 = vst [vmem:[%s160] sm:$0xff] %v164
    %s166 = scalar_lea.vmem %s161, 8 [#allocation0]
    %s167 = scalar_lea.vmem %s166, 7 [#allocation0]
    %v168 = vld [vmem:[%s167] ss:$-1 sm:$0xff]
    %v169 = vrot.slane %v168, 1
    %v170 = vlaneseq
    %v171 = vshrl.u32 %v170, 7
    %vm172 = vcmp.lt.s32.totalorder %v171, 7
    %173 = vst.msk [vmem:[%s160] sm:$0xff] %vm172, %v169
    // Predicated region
    $region36: #{reverse.0} parent=1 // pred_check
      _
    $region37: #{reverse.0} parent=1 // pred_check_branch
      %175 = sbr.rel (0) target = $region39
    $region38: #{reverse.0} parent=1 // pred_region
      // Predicated region
      $region40: #{reverse.0} parent=38 // pred_check
        _
      $region41: #{reverse.0} parent=38 // pred_check_branch
        %177 = sbr.rel (0) target = $region43
      $region42: #{reverse.0} parent=38 // pred_region
        // Predicated region
        $region55: #{reverse.0} parent=42 // pred_check
          _
        $region56: #{reverse.0} parent=42 // pred_check_branch
          %207 = sbr.rel (0) target = $region58
        $region57: #{reverse.0} parent=42 // pred_region
          loop: start=0, step=1, limit=1
          $region59: #{reverse.0} parent=57 // loop_pre_header
            _
          $region60: #{reverse.0} parent=57 // loop_header
            %s209 = sphi 0, %s213
            %p210 = scmp.ge.s32.totalorder %s209, 1
            %s214 = sphi [#allocation1], [#allocation1]
            %s215 = sphi %s1, %s1
          $region61: #{reverse.0} parent=57 // loop_header_branch
            %212 = sbr.rel (%p210) target = $region65
          $region62: #{reverse.0} parent=57 // loop_body
            %v216 = vld [vmem:[%s214] sm:$0xff]
            %217 = vst [vmem:[%s215] sm:$0xff] %v216
            %v218 = vld [vmem:[%s214 + $0x8] sm:$0xff]
            %219 = vst [vmem:[%s215 + $0x8] sm:$0xff] %v218
            %v220 = vld [vmem:[%s214 + $0x10] sm:$0xff]
            %221 = vst [vmem:[%s215 + $0x10] sm:$0xff] %v220
            %v222 = vld [vmem:[%s214 + $0x18] sm:$0xff]
            %223 = vst [vmem:[%s215 + $0x18] sm:$0xff] %v222
            %v224 = vld [vmem:[%s214 + $0x20] sm:$0xff]
            %225 = vst [vmem:[%s215 + $0x20] sm:$0xff] %v224
            %v226 = vld [vmem:[%s214 + $0x28] sm:$0xff]
            %227 = vst [vmem:[%s215 + $0x28] sm:$0xff] %v226
            %v228 = vld [vmem:[%s214 + $0x30] sm:$0xff]
            %229 = vst [vmem:[%s215 + $0x30] sm:$0xff] %v228
            %v230 = vld [vmem:[%s214 + $0x38] sm:$0xff]
            %231 = vst [vmem:[%s215 + $0x38] sm:$0xff] %v230
          $region63: #{reverse.0} parent=57 // loop_footer
            %s213 = sadd.s32 1, %s209
          $region64: #{reverse.0} parent=57 // loop_footer_branch
            %208 = sbr.rel target = $region60
          $region65: #{reverse.0} parent=57 // loop_exit
            _
        $region58: #{reverse.0} parent=42 // pred_fallthru
          _
        // Predicated region
        $region66: #{reverse.0} parent=42 // pred_check
          _
        $region67: #{reverse.0} parent=42 // pred_check_branch
          %233 = sbr.rel target = $region69
        $region68: #{reverse.0} parent=42 // pred_region
          _
        $region69: #{reverse.0} parent=42 // pred_fallthru
          _
      $region43: #{reverse.0} parent=38 // pred_fallthru
        _
      // Predicated region
      $region44: #{reverse.0} parent=38 // pred_check
        _
      $region45: #{reverse.0} parent=38 // pred_check_branch
        %179 = sbr.rel target = $region47
      $region46: #{reverse.0} parent=38 // pred_region
        %s181 = ssub.s32 256, 1
        loop: start=0, step=1, limit=1
        $region48: #{reverse.0} parent=46 // loop_pre_header
          _
        $region49: #{reverse.0} parent=46 // loop_header
          %s183 = sphi 0, %s187
          %p184 = scmp.ge.s32.totalorder %s183, 1
          %s188 = sphi [#allocation1], [#allocation1]
          %s189 = sphi %s1, %s1
        $region50: #{reverse.0} parent=46 // loop_header_branch
          %186 = sbr.rel (%p184) target = $region54
        $region51: #{reverse.0} parent=46 // loop_body
          %v190 = vld [vmem:[%s188] sm:%s181]
          %191 = vst [vmem:[%s189] sm:%s181] %v190
          %v192 = vld [vmem:[%s188 + $0x8] sm:%s181]
          %193 = vst [vmem:[%s189 + $0x8] sm:%s181] %v192
          %v194 = vld [vmem:[%s188 + $0x10] sm:%s181]
          %195 = vst [vmem:[%s189 + $0x10] sm:%s181] %v194
          %v196 = vld [vmem:[%s188 + $0x18] sm:%s181]
          %197 = vst [vmem:[%s189 + $0x18] sm:%s181] %v196
          %v198 = vld [vmem:[%s188 + $0x20] sm:%s181]
          %199 = vst [vmem:[%s189 + $0x20] sm:%s181] %v198
          %v200 = vld [vmem:[%s188 + $0x28] sm:%s181]
          %201 = vst [vmem:[%s189 + $0x28] sm:%s181] %v200
          %v202 = vld [vmem:[%s188 + $0x30] sm:%s181]
          %203 = vst [vmem:[%s189 + $0x30] sm:%s181] %v202
          %v204 = vld [vmem:[%s188 + $0x38] sm:%s181]
          %205 = vst [vmem:[%s189 + $0x38] sm:%s181] %v204
        $region52: #{reverse.0} parent=46 // loop_footer
          %s187 = sadd.s32 1, %s183
        $region53: #{reverse.0} parent=46 // loop_footer_branch
          %182 = sbr.rel target = $region49
        $region54: #{reverse.0} parent=46 // loop_exit
          _
      $region47: #{reverse.0} parent=38 // pred_fallthru
        _
    $region39: #{reverse.0} parent=1 // pred_fallthru
      _
    %234 = vnop

// kernel: freprocess.5
$region0: #{freprocess.5}
  #allocation0 [shape = 'u32[]', space=smem, size = 0x4, offset = 0x4, fixed_abs, tag = 'smem constant byte address 0x4 - core index']
  #allocation1 [shape = 'u32[72,128]{1,0:T(1,128)}', space=vmem, size = 0x9000, scoped, tag = 'internal scratch']
  %s0 = inlined_call_operand.vmem [shape: f32[2,4,256], index: 0, kind: input, shape index: {}]
  %s1 = inlined_call_operand.vmem [shape: f32[4,4], index: 1, kind: input, shape index: {}]
  %s2 = inlined_call_operand.vmem [shape: f32[4,1], index: 2, kind: input, shape index: {}]
  %s3 = inlined_call_operand.vmem [shape: f32[2,4,256], index: 3, kind: output, shape index: {}]
  %s4 = sld [smem:[#allocation0]]
  $region45: #{freprocess.5} parent=0
    _
  %s6 = ssub.s32 1, %s4
  %s7 = scalar_select 0, %s6, %s4
  loop: start=0, step=1, limit=4
  $region2: #{freprocess.5} parent=0 // loop_pre_header
    _
  $region3: #{freprocess.5} parent=0 // loop_header
    %s9 = sphi 0, %s13
    %p10 = scmp.ge.s32.totalorder %s9, 4
    %s16 = sphi 0, %s28
    %s17 = sphi 0, %s24
    %s18 = sphi 0, %s16
    %s19 = sphi 0, %s17
    %s20 = sphi 0, %s18
    %s21 = sphi 0, %s19
    %s33 = sphi 0, %s35
    %s36 = sphi 0, %s33
    %s37 = sphi 0, %s36
    %s53 = sphi 0, %s37
    %s57 = sphi 0, %s57
    %s59 = sphi 0, %s57
    %s60 = sphi 0, %s59
    %s74 = sphi 0, %s60
    %s78 = sphi 0, %s78
    %s80 = sphi 0, %s78
    %s81 = sphi 0, %s80
    %s95 = sphi 0, %s81
    %s103 = sphi 0, %s105
    %s106 = sphi 0, %s103
    %s107 = sphi 0, %s106
    %s123 = sphi 0, %s107
  $region4: #{freprocess.5} parent=0 // loop_header_branch
    %12 = sbr.rel (%p10) target = $region8
  $region5: #{freprocess.5} parent=0 // loop_body
    %s14 = ssub.s32 %s9, 1
    %s15 = ssub.s32 %s9, 2
    %s22 = sadd.s32 1, %s17
    %p23 = scmp.ge.s32.totalorder %s22, 1
    %s24 = scalar_select %p23, 0, %s22
    %s25 = sadd.s32 1, %s16
    %s26 = scalar_select %p23, %s25, %s16
    %p27 = scmp.ge.s32.totalorder %s26, 2
    %s28 = scalar_select %p27, 0, %s26
    %s29 = ssub.s32 %s16, %s28
    %s30 = ssub.s32 %s17, %s24
    %s31 = sor.u32 %s29, %s30
    %p32 = scmp.eq.s32.totalorder %s31, 0
    %s34 = sadd.s32 %s33, 1
    %s35 = scalar_select %p32, %s33, %s34
    %p38 = pneg %p32
    %p39 = scmp.eq.s32.totalorder %s9, 1
    %p40 = por %p38, %p39
    %p41 = scmp.ne.s32.totalorder %s33, %s36
    %p42 = scmp.eq.s32.totalorder %s9, 0
    %p43 = por %p41, %p42
    %p44 = scmp.ne.s32.totalorder %s33, %s36
    %p45 = scmp.eq.s32.totalorder %s14, 1
    %p46 = por %p44, %p45
    %p47 = scmp.ne.s32.totalorder %s36, %s37
    %p48 = scmp.eq.s32.totalorder %s14, 0
    %p49 = por %p47, %p48
    %p50 = scmp.ne.s32.totalorder %s36, %s37
    %p51 = scmp.eq.s32.totalorder %s15, 1
    %p52 = por %p50, %p51
    %p54 = scmp.ne.s32.totalorder %s37, %s53
    %p55 = scmp.eq.s32.totalorder %s15, 0
    %p56 = por %p54, %p55
    %s58 = sadd.s32 %s57, 1
    %p61 = scmp.eq.s32.totalorder %s9, 1
    %p62 = scmp.ne.s32.totalorder %s57, %s59
    %p63 = scmp.eq.s32.totalorder %s9, 0
    %p64 = por %p62, %p63
    %p65 = scmp.ne.s32.totalorder %s57, %s59
    %p66 = scmp.eq.s32.totalorder %s14, 1
    %p67 = por %p65, %p66
    %p68 = scmp.ne.s32.totalorder %s59, %s60
    %p69 = scmp.eq.s32.totalorder %s14, 0
    %p70 = por %p68, %p69
    %p71 = scmp.ne.s32.totalorder %s59, %s60
    %p72 = scmp.eq.s32.totalorder %s15, 1
    %p73 = por %p71, %p72
    %p75 = scmp.ne.s32.totalorder %s60, %s74
    %p76 = scmp.eq.s32.totalorder %s15, 0
    %p77 = por %p75, %p76
    %s79 = sadd.s32 %s78, 1
    %p82 = scmp.eq.s32.totalorder %s9, 1
    %p83 = scmp.ne.s32.totalorder %s78, %s80
    %p84 = scmp.eq.s32.totalorder %s9, 0
    %p85 = por %p83, %p84
    %p86 = scmp.ne.s32.totalorder %s78, %s80
    %p87 = scmp.eq.s32.totalorder %s14, 1
    %p88 = por %p86, %p87
    %p89 = scmp.ne.s32.totalorder %s80, %s81
    %p90 = scmp.eq.s32.totalorder %s14, 0
    %p91 = por %p89, %p90
    %p92 = scmp.ne.s32.totalorder %s80, %s81
    %p93 = scmp.eq.s32.totalorder %s15, 1
    %p94 = por %p92, %p93
    %p96 = scmp.ne.s32.totalorder %s81, %s95
    %p97 = scmp.eq.s32.totalorder %s15, 0
    %p98 = por %p96, %p97
    %s99 = ssub.s32 %s16, %s28
    %s100 = ssub.s32 %s17, %s24
    %s101 = sor.u32 %s99, %s100
    %p102 = scmp.eq.s32.totalorder %s101, 0
    %s104 = sadd.s32 %s103, 1
    %s105 = scalar_select %p102, %s103, %s104
    %p108 = pneg %p102
    %p109 = scmp.eq.s32.totalorder %s9, 1
    %p110 = por %p108, %p109
    %p111 = scmp.ne.s32.totalorder %s103, %s106
    %p112 = scmp.eq.s32.totalorder %s9, 0
    %p113 = por %p111, %p112
    %p114 = scmp.ne.s32.totalorder %s103, %s106
    %p115 = scmp.eq.s32.totalorder %s14, 1
    %p116 = por %p114, %p115
    %p117 = scmp.ne.s32.totalorder %s106, %s107
    %p118 = scmp.eq.s32.totalorder %s14, 0
    %p119 = por %p117, %p118
    %p120 = scmp.ne.s32.totalorder %s106, %s107
    %p121 = scmp.eq.s32.totalorder %s15, 1
    %p122 = por %p120, %p121
    %p124 = scmp.ne.s32.totalorder %s107, %s123
    %p125 = scmp.eq.s32.totalorder %s15, 0
    %p126 = por %p124, %p125
    %p127 = scmp.le.s32.totalorder 1, %s9
    %p128 = scmp.lt.s32.totalorder %s9, 3
    %p129 = pnand %p127, %p128
    %p130 = pneg %p129
    // Predicated region
    $region9: #{freprocess.5} parent=5 // pred_check
      _
    $region10: #{freprocess.5} parent=5 // pred_check_branch
      %132 = sbr.rel (%p129) target = $region12
    $region11: #{freprocess.5} parent=5 // pred_region
      %s133 = ssub.s32 %s9, 1
      // Predicated region
      $region13: #{freprocess.5} parent=11 // pred_check
        %p134 = pneg %p70
      $region14: #{freprocess.5} parent=11 // pred_check_branch
        %136 = sbr.rel (%p134) target = $region16
      $region15: #{freprocess.5} parent=11 // pred_region
        _
      $region16: #{freprocess.5} parent=11 // pred_fallthru
        _
      // Predicated region
      $region17: #{freprocess.5} parent=11 // pred_check
        %p137 = pneg %p91
      $region18: #{freprocess.5} parent=11 // pred_check_branch
        %139 = sbr.rel (%p137) target = $region20
      $region19: #{freprocess.5} parent=11 // pred_region
        _
      $region20: #{freprocess.5} parent=11 // pred_fallthru
        _
    $region12: #{freprocess.5} parent=5 // pred_fallthru
      _
    %p140 = scmp.lt.s32.totalorder %s9, 2
    // Predicated region
    $region21: #{freprocess.5} parent=5 // pred_check
      %p141 = pneg %p140
    $region22: #{freprocess.5} parent=5 // pred_check_branch
      %143 = sbr.rel (%p141) target = $region24
    $region23: #{freprocess.5} parent=5 // pred_region
      // Predicated region
      $region25: #{freprocess.5} parent=23 // pred_check
        %p144 = pneg %p43
      $region26: #{freprocess.5} parent=23 // pred_check_branch
        %146 = sbr.rel (%p144) target = $region28
      $region27: #{freprocess.5} parent=23 // pred_region
        %s147 = smul.u32 2, %s17
        %p148 = scmp.lt.s32.totalorder %s16, 1
        %s149 = scalar_select %p148, %s16, 1
        %p150 = scmp.lt.s32.totalorder %s147, 1
        %s151 = scalar_select %p150, %s147, 1
        %s152 = smul.addr %s149, 2
        %s153 = sadd.s32 %s151, %s152
        %s154 = smul.addr %s153, 4
        %s155 = scalar_lea.vmem %s0, %s154
        %s156 = smul.u32 2, %s17
      $region28: #{freprocess.5} parent=23 // pred_fallthru
        _
    $region24: #{freprocess.5} parent=5 // pred_fallthru
      _
    %p157 = scmp.le.s32.totalorder 1, %s9
    %p158 = scmp.lt.s32.totalorder %s9, 3
    %p159 = pnand %p157, %p158
    %p160 = pneg %p159
    // Predicated region
    $region29: #{freprocess.5} parent=5 // pred_check
      _
    $region30: #{freprocess.5} parent=5 // pred_check_branch
      %162 = sbr.rel (%p159) target = $region32
    $region31: #{freprocess.5} parent=5 // pred_region
      %s163 = ssub.s32 %s9, 1
      %s164 = smul.u32 2, %s19
      %p165 = scmp.lt.s32.totalorder %s18, 1
      %s166 = scalar_select %p165, %s18, 1
      %p167 = scmp.lt.s32.totalorder %s164, 1
      %s168 = scalar_select %p167, %s164, 1
      %s169 = smul.addr %s166, 2
      %s170 = sadd.s32 %s168, %s169
      %s171 = smul.addr %s170, 4
      %s172 = scalar_lea.vmem %s0, %s171
      %p173 = pneg %p49
      %p174 = pneg %p46
      %p175 = pneg %p70
      %p176 = pneg %p67
      %p177 = pneg %p91
      %p178 = pneg %p88
      %p179 = pneg %p119
      %p180 = pneg %p116
      %s181 = smul.u32 2, %s19
      %p182 = scmp.lt.s32.totalorder %s18, 1
      %s183 = scalar_select %p182, %s18, 1
      %p184 = scmp.lt.s32.totalorder %s181, 1
      %s185 = scalar_select %p184, %s181, 1
      %s186 = smul.addr %s183, 2
      %s187 = sadd.s32 %s185, %s186
      %s188 = smul.addr %s187, 4
      %s189 = scalar_lea.vmem %s3, %s188
      %s190 = smul.u32 2, %s19
      %p191 = scmp.lt.s32.totalorder %s18, 1
      %s192 = scalar_select %p191, %s18, 1
      %p193 = scmp.lt.s32.totalorder %s190, 1
      %s194 = scalar_select %p193, %s190, 1
      %s195 = smul.addr %s192, 2
      %s196 = sadd.s32 %s194, %s195
      %s197 = smul.addr %s196, 4
      %s198 = scalar_lea.vmem %s0, %s197
      %s199 = smul.u32 2, %s19
      %s200 = smul.u32 2, %s19
      %p201 = scmp.lt.s32.totalorder %s18, 1
      %s202 = scalar_select %p201, %s18, 1
      %p203 = scmp.lt.s32.totalorder %s200, 1
      %s204 = scalar_select %p203, %s200, 1
      %s205 = smul.addr %s202, 2
      %s206 = sadd.s32 %s204, %s205
      %s207 = smul.addr %s206, 4
      %s208 = scalar_lea.vmem %s3, %s207
      %s209 = smul.u32 2, %s19
      %v210 = vld [vmem:[%s1] sm:$0xf]
      %v211 = vld [vmem:[%s198] sm:$0xff]
      %v212 = vand.u32 2147483647, %v211
      %214 = vset.pattern.permute.xlu0 0
      %215 = vperm.xlu0 %214, %v210
      %v216 = vpop.permute.xlu0 %215
      %v219 = vperm.slane %v212, 0
      %v220 = vperm.slane %v212, 4
      %v223 = vperm.slane %v219, 0
      %v224 = vperm.slane %v220, 0
      %v225 = vmul.f32 %v216, %v223
      %v226 = vmul.f32 %v216, %v224
      %227 = vset.pattern.permute.xlu0 1
      %228 = vperm.xlu0 %227, %v210
      %v229 = vpop.permute.xlu0 %228
      %v231 = vperm.slane %v212, 1
      %v232 = vperm.slane %v212, 5
      %v235 = vperm.slane %v231, 1
      %v236 = vperm.slane %v232, 1
      %v237 = vmul.f32 %v229, %v235
      %v238 = vmul.f32 %v229, %v236
      %v239 = vadd.f32 %v225, %v237
      %v240 = vadd.f32 %v226, %v238
      %241 = vset.pattern.permute.xlu0 2
      %242 = vperm.xlu0 %241, %v210
      %v243 = vpop.permute.xlu0 %242
      %v245 = vperm.slane %v212, 2
      %v246 = vperm.slane %v212, 6
      %v249 = vperm.slane %v245, 2
      %v250 = vperm.slane %v246, 2
      %v251 = vmul.f32 %v243, %v249
      %v252 = vmul.f32 %v243, %v250
      %v253 = vadd.f32 %v239, %v251
      %v254 = vadd.f32 %v240, %v252
      %255 = vset.pattern.permute.xlu0 3
      %256 = vperm.xlu0 %255, %v210
      %v257 = vpop.permute.xlu0 %256
      %v259 = vperm.slane %v212, 3
      %v260 = vperm.slane %v212, 7
      %v263 = vperm.slane %v259, 3
      %v264 = vperm.slane %v260, 3
      %v265 = vmul.f32 %v257, %v263
      %v266 = vmul.f32 %v257, %v264
      %v267 = vadd.f32 %v253, %v265
      %v268 = vadd.f32 %v254, %v266
      %v269 = vld [vmem:[%s2] sm:$0xf]
      %271 = vset.pattern.permute.xlu0 0
      %272 = vperm.xlu0 %271, %v269
      %v273 = vpop.permute.xlu0 %272
      %v275 = vadd.f32 %v267, %v273
      %v276 = vadd.f32 %v268, %v273
      %v279 = vrot.slane %v276, 4
      %vm280 = vcmask 1043456
      %v281 = vsel %vm280, %v275, %v279
      %283 = vst [vmem:[%s208] sm:$0xff] %v281
      %s284 = smul.u32 2, %s19
      %p285 = scmp.lt.s32.totalorder %s18, 1
      %s286 = scalar_select %p285, %s18, 1
      %p287 = scmp.lt.s32.totalorder %s284, 1
      %s288 = scalar_select %p287, %s284, 1
      %s289 = smul.addr %s286, 2
      %s290 = sadd.s32 %s288, %s289
      %s291 = smul.addr %s290, 4
      %s292 = scalar_lea.vmem %s3, %s291
      // Predicated region
      $region33: #{freprocess.5} parent=31 // pred_check
        %p293 = pneg %p116
      $region34: #{freprocess.5} parent=31 // pred_check_branch
        %295 = sbr.rel (%p293) target = $region36
      $region35: #{freprocess.5} parent=31 // pred_region
        %s296 = smul.u32 2, %s19
      $region36: #{freprocess.5} parent=31 // pred_fallthru
        _
    $region32: #{freprocess.5} parent=5 // pred_fallthru
      _
    %p297 = scmp.le.s32.totalorder 2, %s9
    // Predicated region
    $region37: #{freprocess.5} parent=5 // pred_check
      %p298 = pneg %p297
    $region38: #{freprocess.5} parent=5 // pred_check_branch
      %300 = sbr.rel (%p298) target = $region40
    $region39: #{freprocess.5} parent=5 // pred_region
      %s301 = ssub.s32 %s9, 2
      // Predicated region
      $region41: #{freprocess.5} parent=39 // pred_check
        %p302 = pneg %p122
      $region42: #{freprocess.5} parent=39 // pred_check_branch
        %304 = sbr.rel (%p302) target = $region44
      $region43: #{freprocess.5} parent=39 // pred_region
        %s305 = smul.u32 2, %s21
        %p306 = scmp.lt.s32.totalorder %s20, 1
        %s307 = scalar_select %p306, %s20, 1
        %p308 = scmp.lt.s32.totalorder %s305, 1
        %s309 = scalar_select %p308, %s305, 1
        %s310 = smul.addr %s307, 2
        %s311 = sadd.s32 %s309, %s310
        %s312 = smul.addr %s311, 4
        %s313 = scalar_lea.vmem %s3, %s312
      $region44: #{freprocess.5} parent=39 // pred_fallthru
        _
    $region40: #{freprocess.5} parent=5 // pred_fallthru
      _
  $region6: #{freprocess.5} parent=0 // loop_footer
    %s13 = sadd.s32 1, %s9
  $region7: #{freprocess.5} parent=0 // loop_footer_branch
    %8 = sbr.rel target = $region3
  $region8: #{freprocess.5} parent=0 // loop_exit
    _

</llo_original>
